<compile_context>
chip_gen: v7x
topology: tpu7x:2x2x1
jax: 0.10.0
libtpu: 0.0.40
codegen_flags: <defaults>
</compile_context>

<pallas_src>
import jax
import jax.numpy as jnp
from jax import lax
from jax.experimental import pallas as pl
from jax.experimental.pallas import tpu as pltpu


def lstm_tagger_kernel(wid_ref, pid_ref, ew_ref, ep_ref, whh_ref, b_ref,
                       wtag_ref, btag_ref, out_ref):
    # wid_ref  : [T, 1]  int32 word ids
    # pid_ref  : [T, 1]  int32 POS ids
    # ew_ref   : [V, 4H] word_emb pre-folded into the input projection (g-gate x2)
    # ep_ref   : [P, 4H] pos_emb pre-folded into the input projection (g-gate x2)
    # whh_ref  : [H, 4H] LSTM hidden weights, transposed (g-gate x2), order i,f,g,o
    # b_ref    : [1, 4H] b_ih + b_hh (g-gate slice x2)
    # wtag_ref : [H, K]  hidden2tag weights, transposed
    # btag_ref : [1, K]  hidden2tag bias
    # out_ref  : [T, K]  log-softmax tag scores
    T, _ = out_ref.shape
    H = whh_ref.shape[0]
    V = ew_ref.shape[0]
    P = ep_ref.shape[0]

    # --- Fused embedding lookup + input projection (one-hot @ folded table). --
    onehot_w = (lax.broadcasted_iota(jnp.int32, (T, V), 1)
                == wid_ref[...]).astype(jnp.float32)                  # [T, V]
    onehot_p = (lax.broadcasted_iota(jnp.int32, (T, P), 1)
                == pid_ref[...]).astype(jnp.float32)                  # [T, P]
    xw = (jnp.dot(onehot_w, ew_ref[...], preferred_element_type=jnp.float32)
          + jnp.dot(onehot_p, ep_ref[...], preferred_element_type=jnp.float32)
          + b_ref[...])                                               # [T, 4H]

    whh = whh_ref[...]

    # --- LSTM recurrence (statically unrolled, T is compile-time const). -----
    h = jnp.zeros((1, H), jnp.float32)
    c = jnp.zeros((1, H), jnp.float32)
    hs = []
    for t in range(T):
        gates = xw[t:t + 1, :] + jnp.dot(h, whh,
                                         preferred_element_type=jnp.float32)  # [1, 4H]
        # Single sigmoid over the full vreg; g recovered via tanh(x)=2*sig(2x)-1
        # (the 2x is pre-folded into the g-gate rows of the weights/bias).
        sig = jax.nn.sigmoid(gates)
        i_g = sig[:, 0 * H:1 * H]
        f_g = sig[:, 1 * H:2 * H]
        g_g = 2.0 * sig[:, 2 * H:3 * H] - 1.0
        o_g = sig[:, 3 * H:4 * H]
        c = f_g * c + i_g * g_g
        h = o_g * jnp.tanh(c)
        hs.append(h)                                  # register-resident

    # --- Hoisted hidden2tag + log_softmax, single full-tile store. -----------
    hid = jnp.concatenate(hs, axis=0)                                 # [T, H]
    tag = (jnp.dot(hid, wtag_ref[...], preferred_element_type=jnp.float32)
           + btag_ref[...])                                           # [T, K]
    m = jnp.max(tag, axis=-1, keepdims=True)
    lse = jnp.log(jnp.sum(jnp.exp(tag - m), axis=-1, keepdims=True)) + m
    out_ref[...] = tag - lse


def prepare_params(params):
    """One-time weight prep (transpose / bias-sum / embedding fold / g-gate x2).

    Done OUTSIDE the jitted forward so no per-call prep HLOs are issued.
    """
    H = params["w_hh"].shape[1]
    Dw = params["word_emb"].shape[1]
    hp = lax.Precision.HIGHEST

    g_scale = jnp.ones((4 * H, 1), jnp.float32).at[2 * H:3 * H].set(2.0)
    w_ih = params["w_ih"].astype(jnp.float32) * g_scale               # [4H, D]
    w_hh = params["w_hh"].astype(jnp.float32) * g_scale               # [4H, H]
    b = ((params["b_ih"] + params["b_hh"]).astype(jnp.float32)
         * g_scale[:, 0]).reshape(1, -1)                              # [1, 4H]

    wih_t = w_ih.T                                                    # [D, 4H]
    ew = jnp.dot(params["word_emb"].astype(jnp.float32), wih_t[:Dw],
                 precision=hp)                                        # [V, 4H]
    ep = jnp.dot(params["pos_emb"].astype(jnp.float32), wih_t[Dw:],
                 precision=hp)                                        # [P, 4H]

    return {
        "ew": ew,
        "ep": ep,
        "whh_t": w_hh.T,                                              # [H, 4H]
        "b": b,                                                       # [1, 4H]
        "wtag_t": params["w_tag"].astype(jnp.float32).T,              # [H, K]
        "btag": params["b_tag"].astype(jnp.float32).reshape(1, -1),   # [1, K]
    }


def lstm_tagger_forward(sentence, pos, prep):
    T = sentence.shape[0]
    K = prep["btag"].shape[1]

    word_ids = sentence.astype(jnp.int32).reshape(T, 1)
    pos_ids = pos.astype(jnp.int32).reshape(T, 1)

    vmem = pl.BlockSpec(memory_space=pltpu.MemorySpace.VMEM)
    return pl.pallas_call(
        lstm_tagger_kernel,
        out_shape=jax.ShapeDtypeStruct((T, K), jnp.float32),
        in_specs=[vmem] * 8,
        out_specs=vmem,
    )(word_ids, pos_ids, prep["ew"], prep["ep"], prep["whh_t"], prep["b"],
      prep["wtag_t"], prep["btag"])


def reference_forward(sentence, pos, params):
    """Pure-JAX reference matching torch semantics (sanity check)."""
    word_embeds = params["word_emb"][sentence]
    pos_embeds = params["pos_emb"][pos]
    x = jnp.concatenate([word_embeds, pos_embeds], axis=1).astype(jnp.float32)
    H = params["w_hh"].shape[1]

    def cell(carry, x_t):
        h, c = carry
        gates = (x_t @ params["w_ih"].T + params["b_ih"]
                 + h @ params["w_hh"].T + params["b_hh"])
        i_g = jax.nn.sigmoid(gates[0 * H:1 * H])
        f_g = jax.nn.sigmoid(gates[1 * H:2 * H])
        g_g = jnp.tanh(gates[2 * H:3 * H])
        o_g = jax.nn.sigmoid(gates[3 * H:4 * H])
        c = f_g * c + i_g * g_g
        h = o_g * jnp.tanh(c)
        return (h, c), h

    (_, _), hs = lax.scan(cell, (jnp.zeros(H, jnp.float32),
                                 jnp.zeros(H, jnp.float32)), x)
    tag = hs @ params["w_tag"].T + params["b_tag"]
    return jax.nn.log_softmax(tag, axis=1)


def init_params(key, word_dim, pos_dim, hidden_dim, vocab_size, pos_size, tagset_size):
    D = word_dim + pos_dim
    ks = jax.random.split(key, 8)
    s = 1.0 / jnp.sqrt(hidden_dim)
    return {
        # nn.Embedding default init ~ N(0, 1)
        "word_emb": jax.random.normal(ks[0], (vocab_size, word_dim), jnp.float32),
        "pos_emb": jax.random.normal(ks[1], (pos_size, pos_dim), jnp.float32),
        # nn.LSTM default init ~ U(-1/sqrt(H), 1/sqrt(H)), gate order i,f,g,o
        "w_ih": jax.random.uniform(ks[2], (4 * hidden_dim, D), jnp.float32, -s, s),
        "w_hh": jax.random.uniform(ks[3], (4 * hidden_dim, hidden_dim), jnp.float32, -s, s),
        "b_ih": jax.random.uniform(ks[4], (4 * hidden_dim,), jnp.float32, -s, s),
        "b_hh": jax.random.uniform(ks[5], (4 * hidden_dim,), jnp.float32, -s, s),
        # nn.Linear default init ~ U(-1/sqrt(H), 1/sqrt(H))
        "w_tag": jax.random.uniform(ks[6], (tagset_size, hidden_dim), jnp.float32, -s, s),
        "b_tag": jax.random.uniform(ks[7], (tagset_size,), jnp.float32, -s, s),
    }


if __name__ == "__main__":
    word_embedding_dim = 16
    pos_embedding_dim = 16
    hidden_dim = 32
    vocab_size = 50
    pos_size = 12
    tagset_size = 8
    seq_len = 8

    key = jax.random.PRNGKey(0)
    pkey, skey, poskey = jax.random.split(key, 3)
    params = init_params(pkey, word_embedding_dim, pos_embedding_dim, hidden_dim,
                         vocab_size, pos_size, tagset_size)
    prep = prepare_params(params)                       # one-time, outside jit
    prep = jax.tree_util.tree_map(jax.block_until_ready, prep)

    sentence = jax.random.randint(skey, (seq_len,), 0, vocab_size, dtype=jnp.int32)
    pos = jax.random.randint(poskey, (seq_len,), 0, pos_size, dtype=jnp.int32)

    out = jax.jit(lstm_tagger_forward)(sentence, pos, prep)
    out = jax.block_until_ready(out)

    ref = reference_forward(sentence, pos, params)
    assert out.shape == (seq_len, tagset_size)
    assert jnp.allclose(out, ref, atol=1e-5, rtol=1e-5), (
        f"mismatch: max abs err {jnp.max(jnp.abs(out - ref))}")

    print("KERNEL_OK")
</pallas_src>

<mosaic_0001>
module attributes {stable_mosaic.version = 11 : i64} {
  func.func @lstm_tagger_kernel(%arg0: memref<8x1xi32, #tpu.memory_space<vmem>>, %arg1: memref<8x1xi32, #tpu.memory_space<vmem>>, %arg2: memref<50x128xf32, #tpu.memory_space<vmem>>, %arg3: memref<12x128xf32, #tpu.memory_space<vmem>>, %arg4: memref<32x128xf32, #tpu.memory_space<vmem>>, %arg5: memref<1x128xf32, #tpu.memory_space<vmem>>, %arg6: memref<32x8xf32, #tpu.memory_space<vmem>>, %arg7: memref<1x8xf32, #tpu.memory_space<vmem>>, %arg8: memref<8x8xf32, #tpu.memory_space<vmem>>) attributes {dimension_semantics = [], scalar_prefetch = 0 : i64, scratch_operands = 0 : i64, tpu.core_type = #tpu.core_type<tc>} {
    %0 = tpu.iota {dimensions = array<i32: 1>} : vector<8x50xi32>
    %c0 = arith.constant 0 : index
    %c0_0 = arith.constant 0 : index
    %1 = vector.load %arg0[%c0, %c0_0] : memref<8x1xi32, #tpu.memory_space<vmem>>, vector<8x1xi32>
    %2 = vector.broadcast %1 : vector<8x1xi32> to vector<8x50xi32>
    %3 = arith.cmpi eq, %0, %2 : vector<8x50xi32>
    %4 = arith.extui %3 : vector<8x50xi1> to vector<8x50xi32>
    %5 = arith.sitofp %4 : vector<8x50xi32> to vector<8x50xf32>
    %6 = tpu.iota {dimensions = array<i32: 1>} : vector<8x12xi32>
    %c0_1 = arith.constant 0 : index
    %c0_2 = arith.constant 0 : index
    %7 = vector.load %arg1[%c0_1, %c0_2] : memref<8x1xi32, #tpu.memory_space<vmem>>, vector<8x1xi32>
    %8 = vector.broadcast %7 : vector<8x1xi32> to vector<8x12xi32>
    %9 = arith.cmpi eq, %6, %8 : vector<8x12xi32>
    %10 = arith.extui %9 : vector<8x12xi1> to vector<8x12xi32>
    %11 = arith.sitofp %10 : vector<8x12xi32> to vector<8x12xf32>
    %c0_3 = arith.constant 0 : index
    %c0_4 = arith.constant 0 : index
    %12 = vector.load %arg2[%c0_3, %c0_4] : memref<50x128xf32, #tpu.memory_space<vmem>>, vector<50x128xf32>
    %cst = arith.constant dense<0.000000e+00> : vector<8x128xf32>
    %13 = tpu.matmul %5, %12, %cst {dimension_numbers = #tpu.dot_dimension_numbers<[1], [0], [0], [1], [0, 0, 1, 1], [], []>} : vector<8x50xf32>, vector<50x128xf32>, vector<8x128xf32> -> vector<8x128xf32>
    %c0_5 = arith.constant 0 : index
    %c0_6 = arith.constant 0 : index
    %14 = vector.load %arg3[%c0_5, %c0_6] : memref<12x128xf32, #tpu.memory_space<vmem>>, vector<12x128xf32>
    %cst_7 = arith.constant dense<0.000000e+00> : vector<8x128xf32>
    %15 = tpu.matmul %11, %14, %cst_7 {dimension_numbers = #tpu.dot_dimension_numbers<[1], [0], [0], [1], [0, 0, 1, 1], [], []>} : vector<8x12xf32>, vector<12x128xf32>, vector<8x128xf32> -> vector<8x128xf32>
    %16 = arith.addf %13, %15 : vector<8x128xf32>
    %c0_8 = arith.constant 0 : index
    %c0_9 = arith.constant 0 : index
    %17 = vector.load %arg5[%c0_8, %c0_9] : memref<1x128xf32, #tpu.memory_space<vmem>>, vector<1x128xf32>
    %18 = vector.broadcast %17 : vector<1x128xf32> to vector<8x128xf32>
    %19 = arith.addf %16, %18 : vector<8x128xf32>
    %c0_10 = arith.constant 0 : index
    %c0_11 = arith.constant 0 : index
    %20 = vector.load %arg4[%c0_10, %c0_11] : memref<32x128xf32, #tpu.memory_space<vmem>>, vector<32x128xf32>
    %cst_12 = arith.constant 0.000000e+00 : f32
    %21 = vector.broadcast %cst_12 : f32 to vector<1x32xf32>
    %cst_13 = arith.constant 0.000000e+00 : f32
    %22 = vector.broadcast %cst_13 : f32 to vector<1x32xf32>
    %23 = vector.extract_strided_slice %19 {offsets = [0, 0], sizes = [1, 128], strides = [1, 1]} : vector<8x128xf32> to vector<1x128xf32>
    %cst_14 = arith.constant dense<0.000000e+00> : vector<1x128xf32>
    %24 = tpu.matmul %21, %20, %cst_14 {dimension_numbers = #tpu.dot_dimension_numbers<[1], [0], [0], [1], [0, 0, 1, 1], [], []>} : vector<1x32xf32>, vector<32x128xf32>, vector<1x128xf32> -> vector<1x128xf32>
    %25 = arith.addf %23, %24 : vector<1x128xf32>
    %26 = arith.negf %25 : vector<1x128xf32>
    %27 = math.exp %26 : vector<1x128xf32>
    %cst_15 = arith.constant 1.000000e+00 : f32
    %28 = vector.broadcast %cst_15 : f32 to vector<1x128xf32>
    %29 = arith.addf %28, %27 : vector<1x128xf32>
    %30 = arith.divf %28, %29 : vector<1x128xf32>
    %31 = vector.extract_strided_slice %30 {offsets = [0, 0], sizes = [1, 32], strides = [1, 1]} : vector<1x128xf32> to vector<1x32xf32>
    %32 = vector.extract_strided_slice %30 {offsets = [0, 32], sizes = [1, 32], strides = [1, 1]} : vector<1x128xf32> to vector<1x32xf32>
    %33 = vector.extract_strided_slice %30 {offsets = [0, 64], sizes = [1, 32], strides = [1, 1]} : vector<1x128xf32> to vector<1x32xf32>
    %cst_16 = arith.constant 2.000000e+00 : f32
    %34 = vector.broadcast %cst_16 : f32 to vector<1x32xf32>
    %35 = arith.mulf %34, %33 : vector<1x32xf32>
    %cst_17 = arith.constant 1.000000e+00 : f32
    %36 = vector.broadcast %cst_17 : f32 to vector<1x32xf32>
    %37 = arith.subf %35, %36 : vector<1x32xf32>
    %38 = vector.extract_strided_slice %30 {offsets = [0, 96], sizes = [1, 32], strides = [1, 1]} : vector<1x128xf32> to vector<1x32xf32>
    %39 = arith.mulf %32, %22 : vector<1x32xf32>
    %40 = arith.mulf %31, %37 : vector<1x32xf32>
    %41 = arith.addf %39, %40 : vector<1x32xf32>
    %42 = math.tanh %41 : vector<1x32xf32>
    %43 = arith.mulf %38, %42 : vector<1x32xf32>
    %44 = vector.extract_strided_slice %19 {offsets = [1, 0], sizes = [1, 128], strides = [1, 1]} : vector<8x128xf32> to vector<1x128xf32>
    %cst_18 = arith.constant dense<0.000000e+00> : vector<1x128xf32>
    %45 = tpu.matmul %43, %20, %cst_18 {dimension_numbers = #tpu.dot_dimension_numbers<[1], [0], [0], [1], [0, 0, 1, 1], [], []>} : vector<1x32xf32>, vector<32x128xf32>, vector<1x128xf32> -> vector<1x128xf32>
    %46 = arith.addf %44, %45 : vector<1x128xf32>
    %47 = arith.negf %46 : vector<1x128xf32>
    %48 = math.exp %47 : vector<1x128xf32>
    %cst_19 = arith.constant 1.000000e+00 : f32
    %49 = vector.broadcast %cst_19 : f32 to vector<1x128xf32>
    %50 = arith.addf %49, %48 : vector<1x128xf32>
    %51 = arith.divf %49, %50 : vector<1x128xf32>
    %52 = vector.extract_strided_slice %51 {offsets = [0, 0], sizes = [1, 32], strides = [1, 1]} : vector<1x128xf32> to vector<1x32xf32>
    %53 = vector.extract_strided_slice %51 {offsets = [0, 32], sizes = [1, 32], strides = [1, 1]} : vector<1x128xf32> to vector<1x32xf32>
    %54 = vector.extract_strided_slice %51 {offsets = [0, 64], sizes = [1, 32], strides = [1, 1]} : vector<1x128xf32> to vector<1x32xf32>
    %cst_20 = arith.constant 2.000000e+00 : f32
    %55 = vector.broadcast %cst_20 : f32 to vector<1x32xf32>
    %56 = arith.mulf %55, %54 : vector<1x32xf32>
    %cst_21 = arith.constant 1.000000e+00 : f32
    %57 = vector.broadcast %cst_21 : f32 to vector<1x32xf32>
    %58 = arith.subf %56, %57 : vector<1x32xf32>
    %59 = vector.extract_strided_slice %51 {offsets = [0, 96], sizes = [1, 32], strides = [1, 1]} : vector<1x128xf32> to vector<1x32xf32>
    %60 = arith.mulf %53, %41 : vector<1x32xf32>
    %61 = arith.mulf %52, %58 : vector<1x32xf32>
    %62 = arith.addf %60, %61 : vector<1x32xf32>
    %63 = math.tanh %62 : vector<1x32xf32>
    %64 = arith.mulf %59, %63 : vector<1x32xf32>
    %65 = vector.extract_strided_slice %19 {offsets = [2, 0], sizes = [1, 128], strides = [1, 1]} : vector<8x128xf32> to vector<1x128xf32>
    %cst_22 = arith.constant dense<0.000000e+00> : vector<1x128xf32>
    %66 = tpu.matmul %64, %20, %cst_22 {dimension_numbers = #tpu.dot_dimension_numbers<[1], [0], [0], [1], [0, 0, 1, 1], [], []>} : vector<1x32xf32>, vector<32x128xf32>, vector<1x128xf32> -> vector<1x128xf32>
    %67 = arith.addf %65, %66 : vector<1x128xf32>
    %68 = arith.negf %67 : vector<1x128xf32>
    %69 = math.exp %68 : vector<1x128xf32>
    %cst_23 = arith.constant 1.000000e+00 : f32
    %70 = vector.broadcast %cst_23 : f32 to vector<1x128xf32>
    %71 = arith.addf %70, %69 : vector<1x128xf32>
    %72 = arith.divf %70, %71 : vector<1x128xf32>
    %73 = vector.extract_strided_slice %72 {offsets = [0, 0], sizes = [1, 32], strides = [1, 1]} : vector<1x128xf32> to vector<1x32xf32>
    %74 = vector.extract_strided_slice %72 {offsets = [0, 32], sizes = [1, 32], strides = [1, 1]} : vector<1x128xf32> to vector<1x32xf32>
    %75 = vector.extract_strided_slice %72 {offsets = [0, 64], sizes = [1, 32], strides = [1, 1]} : vector<1x128xf32> to vector<1x32xf32>
    %cst_24 = arith.constant 2.000000e+00 : f32
    %76 = vector.broadcast %cst_24 : f32 to vector<1x32xf32>
    %77 = arith.mulf %76, %75 : vector<1x32xf32>
    %cst_25 = arith.constant 1.000000e+00 : f32
    %78 = vector.broadcast %cst_25 : f32 to vector<1x32xf32>
    %79 = arith.subf %77, %78 : vector<1x32xf32>
    %80 = vector.extract_strided_slice %72 {offsets = [0, 96], sizes = [1, 32], strides = [1, 1]} : vector<1x128xf32> to vector<1x32xf32>
    %81 = arith.mulf %74, %62 : vector<1x32xf32>
    %82 = arith.mulf %73, %79 : vector<1x32xf32>
    %83 = arith.addf %81, %82 : vector<1x32xf32>
    %84 = math.tanh %83 : vector<1x32xf32>
    %85 = arith.mulf %80, %84 : vector<1x32xf32>
    %86 = vector.extract_strided_slice %19 {offsets = [3, 0], sizes = [1, 128], strides = [1, 1]} : vector<8x128xf32> to vector<1x128xf32>
    %cst_26 = arith.constant dense<0.000000e+00> : vector<1x128xf32>
    %87 = tpu.matmul %85, %20, %cst_26 {dimension_numbers = #tpu.dot_dimension_numbers<[1], [0], [0], [1], [0, 0, 1, 1], [], []>} : vector<1x32xf32>, vector<32x128xf32>, vector<1x128xf32> -> vector<1x128xf32>
    %88 = arith.addf %86, %87 : vector<1x128xf32>
    %89 = arith.negf %88 : vector<1x128xf32>
    %90 = math.exp %89 : vector<1x128xf32>
    %cst_27 = arith.constant 1.000000e+00 : f32
    %91 = vector.broadcast %cst_27 : f32 to vector<1x128xf32>
    %92 = arith.addf %91, %90 : vector<1x128xf32>
    %93 = arith.divf %91, %92 : vector<1x128xf32>
    %94 = vector.extract_strided_slice %93 {offsets = [0, 0], sizes = [1, 32], strides = [1, 1]} : vector<1x128xf32> to vector<1x32xf32>
    %95 = vector.extract_strided_slice %93 {offsets = [0, 32], sizes = [1, 32], strides = [1, 1]} : vector<1x128xf32> to vector<1x32xf32>
    %96 = vector.extract_strided_slice %93 {offsets = [0, 64], sizes = [1, 32], strides = [1, 1]} : vector<1x128xf32> to vector<1x32xf32>
    %cst_28 = arith.constant 2.000000e+00 : f32
    %97 = vector.broadcast %cst_28 : f32 to vector<1x32xf32>
    %98 = arith.mulf %97, %96 : vector<1x32xf32>
    %cst_29 = arith.constant 1.000000e+00 : f32
    %99 = vector.broadcast %cst_29 : f32 to vector<1x32xf32>
    %100 = arith.subf %98, %99 : vector<1x32xf32>
    %101 = vector.extract_strided_slice %93 {offsets = [0, 96], sizes = [1, 32], strides = [1, 1]} : vector<1x128xf32> to vector<1x32xf32>
    %102 = arith.mulf %95, %83 : vector<1x32xf32>
    %103 = arith.mulf %94, %100 : vector<1x32xf32>
    %104 = arith.addf %102, %103 : vector<1x32xf32>
    %105 = math.tanh %104 : vector<1x32xf32>
    %106 = arith.mulf %101, %105 : vector<1x32xf32>
    %107 = vector.extract_strided_slice %19 {offsets = [4, 0], sizes = [1, 128], strides = [1, 1]} : vector<8x128xf32> to vector<1x128xf32>
    %cst_30 = arith.constant dense<0.000000e+00> : vector<1x128xf32>
    %108 = tpu.matmul %106, %20, %cst_30 {dimension_numbers = #tpu.dot_dimension_numbers<[1], [0], [0], [1], [0, 0, 1, 1], [], []>} : vector<1x32xf32>, vector<32x128xf32>, vector<1x128xf32> -> vector<1x128xf32>
    %109 = arith.addf %107, %108 : vector<1x128xf32>
    %110 = arith.negf %109 : vector<1x128xf32>
    %111 = math.exp %110 : vector<1x128xf32>
    %cst_31 = arith.constant 1.000000e+00 : f32
    %112 = vector.broadcast %cst_31 : f32 to vector<1x128xf32>
    %113 = arith.addf %112, %111 : vector<1x128xf32>
    %114 = arith.divf %112, %113 : vector<1x128xf32>
    %115 = vector.extract_strided_slice %114 {offsets = [0, 0], sizes = [1, 32], strides = [1, 1]} : vector<1x128xf32> to vector<1x32xf32>
    %116 = vector.extract_strided_slice %114 {offsets = [0, 32], sizes = [1, 32], strides = [1, 1]} : vector<1x128xf32> to vector<1x32xf32>
    %117 = vector.extract_strided_slice %114 {offsets = [0, 64], sizes = [1, 32], strides = [1, 1]} : vector<1x128xf32> to vector<1x32xf32>
    %cst_32 = arith.constant 2.000000e+00 : f32
    %118 = vector.broadcast %cst_32 : f32 to vector<1x32xf32>
    %119 = arith.mulf %118, %117 : vector<1x32xf32>
    %cst_33 = arith.constant 1.000000e+00 : f32
    %120 = vector.broadcast %cst_33 : f32 to vector<1x32xf32>
    %121 = arith.subf %119, %120 : vector<1x32xf32>
    %122 = vector.extract_strided_slice %114 {offsets = [0, 96], sizes = [1, 32], strides = [1, 1]} : vector<1x128xf32> to vector<1x32xf32>
    %123 = arith.mulf %116, %104 : vector<1x32xf32>
    %124 = arith.mulf %115, %121 : vector<1x32xf32>
    %125 = arith.addf %123, %124 : vector<1x32xf32>
    %126 = math.tanh %125 : vector<1x32xf32>
    %127 = arith.mulf %122, %126 : vector<1x32xf32>
    %128 = vector.extract_strided_slice %19 {offsets = [5, 0], sizes = [1, 128], strides = [1, 1]} : vector<8x128xf32> to vector<1x128xf32>
    %cst_34 = arith.constant dense<0.000000e+00> : vector<1x128xf32>
    %129 = tpu.matmul %127, %20, %cst_34 {dimension_numbers = #tpu.dot_dimension_numbers<[1], [0], [0], [1], [0, 0, 1, 1], [], []>} : vector<1x32xf32>, vector<32x128xf32>, vector<1x128xf32> -> vector<1x128xf32>
    %130 = arith.addf %128, %129 : vector<1x128xf32>
    %131 = arith.negf %130 : vector<1x128xf32>
    %132 = math.exp %131 : vector<1x128xf32>
    %cst_35 = arith.constant 1.000000e+00 : f32
    %133 = vector.broadcast %cst_35 : f32 to vector<1x128xf32>
    %134 = arith.addf %133, %132 : vector<1x128xf32>
    %135 = arith.divf %133, %134 : vector<1x128xf32>
    %136 = vector.extract_strided_slice %135 {offsets = [0, 0], sizes = [1, 32], strides = [1, 1]} : vector<1x128xf32> to vector<1x32xf32>
    %137 = vector.extract_strided_slice %135 {offsets = [0, 32], sizes = [1, 32], strides = [1, 1]} : vector<1x128xf32> to vector<1x32xf32>
    %138 = vector.extract_strided_slice %135 {offsets = [0, 64], sizes = [1, 32], strides = [1, 1]} : vector<1x128xf32> to vector<1x32xf32>
    %cst_36 = arith.constant 2.000000e+00 : f32
    %139 = vector.broadcast %cst_36 : f32 to vector<1x32xf32>
    %140 = arith.mulf %139, %138 : vector<1x32xf32>
    %cst_37 = arith.constant 1.000000e+00 : f32
    %141 = vector.broadcast %cst_37 : f32 to vector<1x32xf32>
    %142 = arith.subf %140, %141 : vector<1x32xf32>
    %143 = vector.extract_strided_slice %135 {offsets = [0, 96], sizes = [1, 32], strides = [1, 1]} : vector<1x128xf32> to vector<1x32xf32>
    %144 = arith.mulf %137, %125 : vector<1x32xf32>
    %145 = arith.mulf %136, %142 : vector<1x32xf32>
    %146 = arith.addf %144, %145 : vector<1x32xf32>
    %147 = math.tanh %146 : vector<1x32xf32>
    %148 = arith.mulf %143, %147 : vector<1x32xf32>
    %149 = vector.extract_strided_slice %19 {offsets = [6, 0], sizes = [1, 128], strides = [1, 1]} : vector<8x128xf32> to vector<1x128xf32>
    %cst_38 = arith.constant dense<0.000000e+00> : vector<1x128xf32>
    %150 = tpu.matmul %148, %20, %cst_38 {dimension_numbers = #tpu.dot_dimension_numbers<[1], [0], [0], [1], [0, 0, 1, 1], [], []>} : vector<1x32xf32>, vector<32x128xf32>, vector<1x128xf32> -> vector<1x128xf32>
    %151 = arith.addf %149, %150 : vector<1x128xf32>
    %152 = arith.negf %151 : vector<1x128xf32>
    %153 = math.exp %152 : vector<1x128xf32>
    %cst_39 = arith.constant 1.000000e+00 : f32
    %154 = vector.broadcast %cst_39 : f32 to vector<1x128xf32>
    %155 = arith.addf %154, %153 : vector<1x128xf32>
    %156 = arith.divf %154, %155 : vector<1x128xf32>
    %157 = vector.extract_strided_slice %156 {offsets = [0, 0], sizes = [1, 32], strides = [1, 1]} : vector<1x128xf32> to vector<1x32xf32>
    %158 = vector.extract_strided_slice %156 {offsets = [0, 32], sizes = [1, 32], strides = [1, 1]} : vector<1x128xf32> to vector<1x32xf32>
    %159 = vector.extract_strided_slice %156 {offsets = [0, 64], sizes = [1, 32], strides = [1, 1]} : vector<1x128xf32> to vector<1x32xf32>
    %cst_40 = arith.constant 2.000000e+00 : f32
    %160 = vector.broadcast %cst_40 : f32 to vector<1x32xf32>
    %161 = arith.mulf %160, %159 : vector<1x32xf32>
    %cst_41 = arith.constant 1.000000e+00 : f32
    %162 = vector.broadcast %cst_41 : f32 to vector<1x32xf32>
    %163 = arith.subf %161, %162 : vector<1x32xf32>
    %164 = vector.extract_strided_slice %156 {offsets = [0, 96], sizes = [1, 32], strides = [1, 1]} : vector<1x128xf32> to vector<1x32xf32>
    %165 = arith.mulf %158, %146 : vector<1x32xf32>
    %166 = arith.mulf %157, %163 : vector<1x32xf32>
    %167 = arith.addf %165, %166 : vector<1x32xf32>
    %168 = math.tanh %167 : vector<1x32xf32>
    %169 = arith.mulf %164, %168 : vector<1x32xf32>
    %170 = vector.extract_strided_slice %19 {offsets = [7, 0], sizes = [1, 128], strides = [1, 1]} : vector<8x128xf32> to vector<1x128xf32>
    %cst_42 = arith.constant dense<0.000000e+00> : vector<1x128xf32>
    %171 = tpu.matmul %169, %20, %cst_42 {dimension_numbers = #tpu.dot_dimension_numbers<[1], [0], [0], [1], [0, 0, 1, 1], [], []>} : vector<1x32xf32>, vector<32x128xf32>, vector<1x128xf32> -> vector<1x128xf32>
    %172 = arith.addf %170, %171 : vector<1x128xf32>
    %173 = arith.negf %172 : vector<1x128xf32>
    %174 = math.exp %173 : vector<1x128xf32>
    %cst_43 = arith.constant 1.000000e+00 : f32
    %175 = vector.broadcast %cst_43 : f32 to vector<1x128xf32>
    %176 = arith.addf %175, %174 : vector<1x128xf32>
    %177 = arith.divf %175, %176 : vector<1x128xf32>
    %178 = vector.extract_strided_slice %177 {offsets = [0, 0], sizes = [1, 32], strides = [1, 1]} : vector<1x128xf32> to vector<1x32xf32>
    %179 = vector.extract_strided_slice %177 {offsets = [0, 32], sizes = [1, 32], strides = [1, 1]} : vector<1x128xf32> to vector<1x32xf32>
    %180 = vector.extract_strided_slice %177 {offsets = [0, 64], sizes = [1, 32], strides = [1, 1]} : vector<1x128xf32> to vector<1x32xf32>
    %cst_44 = arith.constant 2.000000e+00 : f32
    %181 = vector.broadcast %cst_44 : f32 to vector<1x32xf32>
    %182 = arith.mulf %181, %180 : vector<1x32xf32>
    %cst_45 = arith.constant 1.000000e+00 : f32
    %183 = vector.broadcast %cst_45 : f32 to vector<1x32xf32>
    %184 = arith.subf %182, %183 : vector<1x32xf32>
    %185 = vector.extract_strided_slice %177 {offsets = [0, 96], sizes = [1, 32], strides = [1, 1]} : vector<1x128xf32> to vector<1x32xf32>
    %186 = arith.mulf %179, %167 : vector<1x32xf32>
    %187 = arith.mulf %178, %184 : vector<1x32xf32>
    %188 = arith.addf %186, %187 : vector<1x32xf32>
    %189 = math.tanh %188 : vector<1x32xf32>
    %190 = arith.mulf %185, %189 : vector<1x32xf32>
    %191 = tpu.concatenate %43, %64, %85, %106, %127, %148, %169, %190 in 0 : vector<1x32xf32>, vector<1x32xf32>, vector<1x32xf32>, vector<1x32xf32>, vector<1x32xf32>, vector<1x32xf32>, vector<1x32xf32>, vector<1x32xf32> -> vector<8x32xf32>
    %c0_46 = arith.constant 0 : index
    %c0_47 = arith.constant 0 : index
    %192 = vector.load %arg6[%c0_46, %c0_47] : memref<32x8xf32, #tpu.memory_space<vmem>>, vector<32x8xf32>
    %cst_48 = arith.constant dense<0.000000e+00> : vector<8x8xf32>
    %193 = tpu.matmul %191, %192, %cst_48 {dimension_numbers = #tpu.dot_dimension_numbers<[1], [0], [0], [1], [0, 0, 1, 1], [], []>} : vector<8x32xf32>, vector<32x8xf32>, vector<8x8xf32> -> vector<8x8xf32>
    %c0_49 = arith.constant 0 : index
    %c0_50 = arith.constant 0 : index
    %194 = vector.load %arg7[%c0_49, %c0_50] : memref<1x8xf32, #tpu.memory_space<vmem>>, vector<1x8xf32>
    %195 = vector.broadcast %194 : vector<1x8xf32> to vector<8x8xf32>
    %196 = arith.addf %193, %195 : vector<8x8xf32>
    %cst_51 = arith.constant dense<0xFF800000> : vector<8xf32>
    %197 = vector.multi_reduction <maximumf>, %196, %cst_51 [1] : vector<8x8xf32> to vector<8xf32>
    %198 = vector.shape_cast %197 : vector<8xf32> to vector<8x1xf32>
    %199 = vector.broadcast %198 : vector<8x1xf32> to vector<8x8xf32>
    %200 = arith.subf %196, %199 : vector<8x8xf32>
    %201 = math.exp %200 : vector<8x8xf32>
    %cst_52 = arith.constant dense<0.000000e+00> : vector<8xf32>
    %202 = vector.multi_reduction <add>, %201, %cst_52 [1] : vector<8x8xf32> to vector<8xf32>
    %203 = vector.shape_cast %202 : vector<8xf32> to vector<8x1xf32>
    %204 = math.log %203 : vector<8x1xf32>
    %205 = arith.addf %204, %198 : vector<8x1xf32>
    %206 = vector.broadcast %205 : vector<8x1xf32> to vector<8x8xf32>
    %207 = arith.subf %196, %206 : vector<8x8xf32>
    %c0_53 = arith.constant 0 : index
    %c0_54 = arith.constant 0 : index
    %208 = vector.load %arg8[%c0_53, %c0_54] : memref<8x8xf32, #tpu.memory_space<vmem>>, vector<8x8xf32>
    tpu.vector_store %arg8[%c0_53, %c0_54], %207 {strides = array<i32>} : memref<8x8xf32, #tpu.memory_space<vmem>>, vector<8x8xf32>,
    return
  }
}

</mosaic_0001>

<llo_original>
// kernel: lstm_tagger_forward.1
$region0: #{lstm_tagger_forward.1}
  #allocation0 [shape = 'u32[]', space=smem, size = 0x4, offset = 0x4, fixed_abs, tag = 'smem constant byte address 0x4 - core index']
  #allocation1 [shape = 'u32[144,128]{1,0:T(1,128)}', space=vmem, size = 0x12000, scoped, tag = 'internal scratch']
  %s0 = inlined_call_operand.vmem [shape: s32[8,1], index: 0, kind: input, shape index: {}]
  %s1 = inlined_call_operand.vmem [shape: s32[8,1], index: 1, kind: input, shape index: {}]
  %s2 = inlined_call_operand.vmem [shape: f32[50,128], index: 2, kind: input, shape index: {}]
  %s3 = inlined_call_operand.hbm [shape: f32[12,128], index: 3, kind: input, shape index: {}]
  %s4 = inlined_call_operand.vmem [shape: f32[32,128], index: 4, kind: input, shape index: {}]
  %s5 = inlined_call_operand.hbm [shape: f32[1,128], index: 5, kind: input, shape index: {}]
  %s6 = inlined_call_operand.vmem [shape: f32[32,8], index: 6, kind: input, shape index: {}]
  %s7 = inlined_call_operand.hbm [shape: f32[1,8], index: 7, kind: input, shape index: {}]
  %s8 = inlined_call_operand.hbm [shape: f32[8,8], index: 8, kind: output, shape index: {}]
  %s9 = sld [smem:[#allocation0]]
  $region54: #{lstm_tagger_forward.1} parent=0
    _
  %s11 = ssub.s32 1, %s9
  %s12 = scalar_select 0, %s11, %s9
  $region1: #{lstm_tagger_forward.1} parent=0
    #allocation2 [shape = 'u8[8192]{0}', space=vmem, size = 0x2000, scoped, tag = 'input window, operand 3, single buffered']
    #allocation3 [shape = 's32[1]{0}', space=sflag, size = 0x4, scoped, tag = 'scoped memory for lstm_tagger_forward.1']
    #allocation4 [shape = 's32[1]{0}', space=sflag, size = 0x4, scoped, tag = 'scoped memory for lstm_tagger_forward.1']
    #allocation5 [shape = 'u8[512]{0}', space=vmem, size = 0x400, scoped, tag = 'input window, operand 5, single buffered']
    #allocation6 [shape = 's32[1]{0}', space=sflag, size = 0x4, scoped, tag = 'scoped memory for lstm_tagger_forward.1']
    #allocation7 [shape = 'u8[512]{0}', space=vmem, size = 0x400, scoped, tag = 'input window, operand 7, single buffered']
    #allocation8 [shape = 'u8[4096]{0}', space=vmem, size = 0x1000, scoped, tag = 'output window, operand 0, single buffered']
    %13 = vsyncpa [#allocation3], 0
    %14 = vsyncpa [#allocation6], 0
    %15 = vsyncpa [#allocation4], 0
    // Predicated region
    $region2: #{lstm_tagger_forward.1} parent=1 // pred_check
      _
    $region3: #{lstm_tagger_forward.1} parent=1 // pred_check_branch
      %17 = sbr.rel (0) target = $region5
    $region4: #{lstm_tagger_forward.1} parent=1 // pred_region
      _
    $region5: #{lstm_tagger_forward.1} parent=1 // pred_fallthru
      _
    // Predicated region
    $region6: #{lstm_tagger_forward.1} parent=1 // pred_check
      _
    $region7: #{lstm_tagger_forward.1} parent=1 // pred_check_branch
      %19 = sbr.rel (0) target = $region9
    $region8: #{lstm_tagger_forward.1} parent=1 // pred_region
      _
    $region9: #{lstm_tagger_forward.1} parent=1 // pred_fallthru
      _
    // Predicated region
    $region10: #{lstm_tagger_forward.1} parent=1 // pred_check
      _
    $region11: #{lstm_tagger_forward.1} parent=1 // pred_check_branch
      %21 = sbr.rel (0) target = $region13
    $region12: #{lstm_tagger_forward.1} parent=1 // pred_region
      _
    $region13: #{lstm_tagger_forward.1} parent=1 // pred_fallthru
      _
    // Predicated region
    $region14: #{lstm_tagger_forward.1} parent=1 // pred_check
      _
    $region15: #{lstm_tagger_forward.1} parent=1 // pred_check_branch
      %23 = sbr.rel (0) target = $region17
    $region16: #{lstm_tagger_forward.1} parent=1 // pred_region
      %s25 = ssub.s32 256, 256
      %26 = vsyncadd [#allocation3], %s25
      %s27 = sshll.u32 [#allocation2], 4
      %s28 = int_to_ptr.vmem [resolvable:$true] %s27
      %33 = dma.hbm_to_vmem [thread:$0]  %s3, 256, %s28, [#allocation3], 128, 128, 8
    $region17: #{lstm_tagger_forward.1} parent=1 // pred_fallthru
      _
    // Predicated region
    $region18: #{lstm_tagger_forward.1} parent=1 // pred_check
      _
    $region19: #{lstm_tagger_forward.1} parent=1 // pred_check_branch
      %35 = sbr.rel (0) target = $region21
    $region20: #{lstm_tagger_forward.1} parent=1 // pred_region
      _
    $region21: #{lstm_tagger_forward.1} parent=1 // pred_fallthru
      _
    // Predicated region
    $region22: #{lstm_tagger_forward.1} parent=1 // pred_check
      _
    $region23: #{lstm_tagger_forward.1} parent=1 // pred_check_branch
      %37 = sbr.rel (0) target = $region25
    $region24: #{lstm_tagger_forward.1} parent=1 // pred_region
      %s39 = ssub.s32 16, 16
      %40 = vsyncadd [#allocation6], %s39
      %s42 = sshll.u32 [#allocation5], 4
      %s43 = int_to_ptr.vmem [resolvable:$true] %s42
      %45 = dma.hbm_to_vmem [thread:$0]  %s5, 16, %s43, [#allocation6]
    $region25: #{lstm_tagger_forward.1} parent=1 // pred_fallthru
      _
    // Predicated region
    $region26: #{lstm_tagger_forward.1} parent=1 // pred_check
      _
    $region27: #{lstm_tagger_forward.1} parent=1 // pred_check_branch
      %47 = sbr.rel (0) target = $region29
    $region28: #{lstm_tagger_forward.1} parent=1 // pred_region
      _
    $region29: #{lstm_tagger_forward.1} parent=1 // pred_fallthru
      _
    // Predicated region
    $region30: #{lstm_tagger_forward.1} parent=1 // pred_check
      _
    $region31: #{lstm_tagger_forward.1} parent=1 // pred_check_branch
      %49 = sbr.rel (0) target = $region33
    $region32: #{lstm_tagger_forward.1} parent=1 // pred_region
      %s51 = ssub.s32 16, 16
      %52 = vsyncadd [#allocation6], %s51
      %s54 = sshll.u32 [#allocation7], 4
      %s55 = int_to_ptr.vmem [resolvable:$true] %s54
      %57 = dma.hbm_to_vmem [thread:$0]  %s7, 16, %s55, [#allocation6]
    $region33: #{lstm_tagger_forward.1} parent=1 // pred_fallthru
      _
    // Predicated region
    $region34: #{lstm_tagger_forward.1} parent=1 // pred_check
      _
    $region35: #{lstm_tagger_forward.1} parent=1 // pred_check_branch
      %59 = sbr.rel (0) target = $region37
    $region36: #{lstm_tagger_forward.1} parent=1 // pred_region
      %60 = dma.done [#allocation3], 256
    $region37: #{lstm_tagger_forward.1} parent=1 // pred_fallthru
      _
    // Predicated region
    $region38: #{lstm_tagger_forward.1} parent=1 // pred_check
      _
    $region39: #{lstm_tagger_forward.1} parent=1 // pred_check_branch
      %62 = sbr.rel (0) target = $region41
    $region40: #{lstm_tagger_forward.1} parent=1 // pred_region
      %63 = dma.done [#allocation6], 16
    $region41: #{lstm_tagger_forward.1} parent=1 // pred_fallthru
      _
    // Predicated region
    $region42: #{lstm_tagger_forward.1} parent=1 // pred_check
      _
    $region43: #{lstm_tagger_forward.1} parent=1 // pred_check_branch
      %65 = sbr.rel (0) target = $region45
    $region44: #{lstm_tagger_forward.1} parent=1 // pred_region
      %66 = dma.done [#allocation6], 16
    $region45: #{lstm_tagger_forward.1} parent=1 // pred_fallthru
      _
    %v67 = vlaneseq
    %v68 = vand.u32 %v67, 127
    %v69 = vld [vmem:[%s0] sm:$0xff]
    %70 = vset.pattern.permute.xlu0 0
    %71 = vperm.xlu0 %70, %v69
    %v72 = vpop.permute.xlu0 %71
    %vm73 = vcmp.eq.s32.totalorder %v68, %v72
    %v74 = vsel %vm73, 1, 0
    %v75 = vcvt.s32.f32 %v74
    %v76 = vld [vmem:[%s1] sm:$0xff]
    %77 = vset.pattern.permute.xlu0 0
    %78 = vperm.xlu0 %77, %v76
    %v79 = vpop.permute.xlu0 %78
    %vm80 = vcmp.eq.s32.totalorder %v68, %v79
    %v81 = vsel %vm80, 1, 0
    %v82 = vcvt.s32.f32 %v81
    %v83 = vld [vmem:[%s2] sm:$0xff]
    %v84 = vld [vmem:[%s2 + $0x8] sm:$0xff]
    %v85 = vld [vmem:[%s2 + $0x10] sm:$0xff]
    %v86 = vld [vmem:[%s2 + $0x18] sm:$0xff]
    %v87 = vld [vmem:[%s2 + $0x20] sm:$0xff]
    %v88 = vld [vmem:[%s2 + $0x28] sm:$0xff]
    %v89 = vld [vmem:[%s2 + $0x30] sm:$0x3]
    %v90 = vld [vmem:[#allocation2] sm:$0xff]
    %v91 = vld [vmem:[#allocation2 + $0x8] sm:$0xf]
    %vm92 = vcmask 97280
    %v94 = vsel %vm92, %v82, 0
    %vm96 = vcmask 1043456
    %v98 = vsel %vm96, %v91, 0
    %100 = vmatprep.subr.mxu0 0.0
    %101 = vmatpush1.msra.mxu0 %v90
    %102 = vmatprep.subr.mxu0 0.0
    %103 = vmatpush1.msra.mxu0 %v98
    %104 = vmatprep.subr.mxu0 0.0
    %105 = vmatpush1.msra.mxu0 0.0
    %106 = vmatprep.subr.mxu0 0.0
    %107 = vmatpush1.msra.mxu0 0.0
    %108 = vmatprep.subr.mxu0 0.0
    %109 = vmatpush1.msra.mxu0 0.0
    %110 = vmatprep.subr.mxu0 0.0
    %111 = vmatpush1.msra.mxu0 0.0
    %112 = vmatprep.subr.mxu0 0.0
    %113 = vmatpush1.msra.mxu0 0.0
    %114 = vmatprep.subr.mxu0 0.0
    %115 = vmatpush1.msra.mxu0 0.0
    %116 = vmatprep.subr.mxu0 0.0
    %117 = vmatpush1.msra.mxu0 0.0
    %118 = vmatprep.subr.mxu0 0.0
    %119 = vmatpush1.msra.mxu0 0.0
    %120 = vmatprep.subr.mxu0 0.0
    %121 = vmatpush1.msra.mxu0 0.0
    %122 = vmatprep.subr.mxu0 0.0
    %123 = vmatpush1.msra.mxu0 0.0
    %124 = vmatprep.subr.mxu0 0.0
    %125 = vmatpush1.msra.mxu0 0.0
    %126 = vmatprep.subr.mxu0 0.0
    %127 = vmatpush1.msra.mxu0 0.0
    %128 = vmatprep.subr.mxu0 0.0
    %129 = vmatpush1.msra.mxu0 0.0
    %130 = vmatprep.subr.mxu0 0.0
    %131 = vmatpush1.msra.mxu0 0.0
    %132 = vmatprep.subr.mxu0 0.0
    %133 = vmatpush1.msra.mxu0 0.0
    %134 = vmatprep.subr.mxu0 0.0
    %135 = vmatpush1.msra.mxu0 0.0
    %136 = vmatprep.subr.mxu0 0.0
    %137 = vmatpush1.msra.mxu0 0.0
    %138 = vmatprep.subr.mxu0 0.0
    %139 = vmatpush1.msra.mxu0 0.0
    %140 = vmatprep.subr.mxu0 0.0
    %141 = vmatpush1.msra.mxu0 0.0
    %142 = vmatprep.subr.mxu0 0.0
    %143 = vmatpush1.msra.mxu0 0.0
    %144 = vmatprep.subr.mxu0 0.0
    %145 = vmatpush1.msra.mxu0 0.0
    %146 = vmatprep.subr.mxu0 0.0
    %147 = vmatpush1.msra.mxu0 0.0
    %148 = vmatprep.subr.mxu0 0.0
    %149 = vmatpush1.msra.mxu0 0.0
    %150 = vmatprep.subr.mxu0 0.0
    %151 = vmatpush1.msra.mxu0 0.0
    %152 = vmatprep.subr.mxu0 0.0
    %153 = vmatpush1.msra.mxu0 0.0
    %154 = vmatprep.subr.mxu0 0.0
    %155 = vmatpush1.msra.mxu0 0.0
    %156 = vmatprep.subr.mxu0 0.0
    %157 = vmatpush1.msra.mxu0 0.0
    %158 = vmatprep.subr.mxu0 0.0
    %159 = vmatpush1.msra.mxu0 0.0
    %160 = vmatprep.subr.mxu0 0.0
    %161 = vmatpush1.msra.mxu0 0.0
    %162 = vmatprep.subr.mxu0 0.0
    %163 = vmatpush1.msra.mxu0 0.0
    %164 = vmatprep.mubr.f32.mxu0 0.0
    %165 = vmatmul.mubr.f32.gmra.mrb[0].mxu0 %v94
    %v166 = vpop.f32.mrb[0].mxu0
    %v167 = vadd.f32 0.0, %v166
    %v168 = vpop.f32.mrb[0].mxu0
    %169 = vdwg.mxu0
    %vm170 = vcmask 408576
    %v172 = vsel %vm170, %v75, 0
    %vm174 = vcmask 1041408
    %v176 = vsel %vm174, %v89, 0
    %178 = vmatprep.subr.mxu0 0.0
    %179 = vmatpush1.msra.mxu0 %v83
    %180 = vmatprep.subr.mxu0 0.0
    %181 = vmatpush1.msra.mxu0 %v84
    %182 = vmatprep.subr.mxu0 0.0
    %183 = vmatpush1.msra.mxu0 %v85
    %184 = vmatprep.subr.mxu0 0.0
    %185 = vmatpush1.msra.mxu0 %v86
    %186 = vmatprep.subr.mxu0 0.0
    %187 = vmatpush1.msra.mxu0 %v87
    %188 = vmatprep.subr.mxu0 0.0
    %189 = vmatpush1.msra.mxu0 %v88
    %190 = vmatprep.subr.mxu0 0.0
    %191 = vmatpush1.msra.mxu0 %v176
    %192 = vmatprep.subr.mxu0 0.0
    %193 = vmatpush1.msra.mxu0 0.0
    %194 = vmatprep.subr.mxu0 0.0
    %195 = vmatpush1.msra.mxu0 0.0
    %196 = vmatprep.subr.mxu0 0.0
    %197 = vmatpush1.msra.mxu0 0.0
    %198 = vmatprep.subr.mxu0 0.0
    %199 = vmatpush1.msra.mxu0 0.0
    %200 = vmatprep.subr.mxu0 0.0
    %201 = vmatpush1.msra.mxu0 0.0
    %202 = vmatprep.subr.mxu0 0.0
    %203 = vmatpush1.msra.mxu0 0.0
    %204 = vmatprep.subr.mxu0 0.0
    %205 = vmatpush1.msra.mxu0 0.0
    %206 = vmatprep.subr.mxu0 0.0
    %207 = vmatpush1.msra.mxu0 0.0
    %208 = vmatprep.subr.mxu0 0.0
    %209 = vmatpush1.msra.mxu0 0.0
    %210 = vmatprep.subr.mxu0 0.0
    %211 = vmatpush1.msra.mxu0 0.0
    %212 = vmatprep.subr.mxu0 0.0
    %213 = vmatpush1.msra.mxu0 0.0
    %214 = vmatprep.subr.mxu0 0.0
    %215 = vmatpush1.msra.mxu0 0.0
    %216 = vmatprep.subr.mxu0 0.0
    %217 = vmatpush1.msra.mxu0 0.0
    %218 = vmatprep.subr.mxu0 0.0
    %219 = vmatpush1.msra.mxu0 0.0
    %220 = vmatprep.subr.mxu0 0.0
    %221 = vmatpush1.msra.mxu0 0.0
    %222 = vmatprep.subr.mxu0 0.0
    %223 = vmatpush1.msra.mxu0 0.0
    %224 = vmatprep.subr.mxu0 0.0
    %225 = vmatpush1.msra.mxu0 0.0
    %226 = vmatprep.subr.mxu0 0.0
    %227 = vmatpush1.msra.mxu0 0.0
    %228 = vmatprep.subr.mxu0 0.0
    %229 = vmatpush1.msra.mxu0 0.0
    %230 = vmatprep.subr.mxu0 0.0
    %231 = vmatpush1.msra.mxu0 0.0
    %232 = vmatprep.subr.mxu0 0.0
    %233 = vmatpush1.msra.mxu0 0.0
    %234 = vmatprep.subr.mxu0 0.0
    %235 = vmatpush1.msra.mxu0 0.0
    %236 = vmatprep.subr.mxu0 0.0
    %237 = vmatpush1.msra.mxu0 0.0
    %238 = vmatprep.subr.mxu0 0.0
    %239 = vmatpush1.msra.mxu0 0.0
    %240 = vmatprep.subr.mxu0 0.0
    %241 = vmatpush1.msra.mxu0 0.0
    %242 = vmatprep.mubr.f32.mxu0 0.0
    %243 = vmatmul.mubr.f32.gmra.mrb[0].mxu0 %v172
    %v244 = vpop.f32.mrb[0].mxu0
    %v245 = vadd.f32 %v167, %v244
    %v246 = vpop.f32.mrb[0].mxu0
    %247 = vdwg.mxu0
    %v248 = vld [vmem:[#allocation5] sm:$0x1]
    %v250 = vlaneseq
    %v251 = vshrl.u32 %v250, 7
    %v252 = vsub.s32 0, %v251
    %v253 = vrot.slane %v248, %v252
    %v255 = vadd.f32 %v245, %v253
    %v256 = vld [vmem:[%s4] sm:$0xff]
    %v257 = vld [vmem:[%s4 + $0x8] sm:$0xff]
    %v258 = vld [vmem:[%s4 + $0x10] sm:$0xff]
    %v259 = vld [vmem:[%s4 + $0x18] sm:$0xff]
    %vm260 = vcmask 261120
    %v262 = vsel %vm260, 0.0, 0
    %264 = vmatprep.subr.mxu0 0.0
    %265 = vmatpush1.msra.mxu0 %v256
    %266 = vmatprep.subr.mxu0 0.0
    %267 = vmatpush1.msra.mxu0 %v257
    %268 = vmatprep.subr.mxu0 0.0
    %269 = vmatpush1.msra.mxu0 %v258
    %270 = vmatprep.subr.mxu0 0.0
    %271 = vmatpush1.msra.mxu0 %v259
    %272 = vmatprep.subr.mxu0 0.0
    %273 = vmatpush1.msra.mxu0 0.0
    %274 = vmatprep.subr.mxu0 0.0
    %275 = vmatpush1.msra.mxu0 0.0
    %276 = vmatprep.subr.mxu0 0.0
    %277 = vmatpush1.msra.mxu0 0.0
    %278 = vmatprep.subr.mxu0 0.0
    %279 = vmatpush1.msra.mxu0 0.0
    %280 = vmatprep.subr.mxu0 0.0
    %281 = vmatpush1.msra.mxu0 0.0
    %282 = vmatprep.subr.mxu0 0.0
    %283 = vmatpush1.msra.mxu0 0.0
    %284 = vmatprep.subr.mxu0 0.0
    %285 = vmatpush1.msra.mxu0 0.0
    %286 = vmatprep.subr.mxu0 0.0
    %287 = vmatpush1.msra.mxu0 0.0
    %288 = vmatprep.subr.mxu0 0.0
    %289 = vmatpush1.msra.mxu0 0.0
    %290 = vmatprep.subr.mxu0 0.0
    %291 = vmatpush1.msra.mxu0 0.0
    %292 = vmatprep.subr.mxu0 0.0
    %293 = vmatpush1.msra.mxu0 0.0
    %294 = vmatprep.subr.mxu0 0.0
    %295 = vmatpush1.msra.mxu0 0.0
    %296 = vmatprep.subr.mxu0 0.0
    %297 = vmatpush1.msra.mxu0 0.0
    %298 = vmatprep.subr.mxu0 0.0
    %299 = vmatpush1.msra.mxu0 0.0
    %300 = vmatprep.subr.mxu0 0.0
    %301 = vmatpush1.msra.mxu0 0.0
    %302 = vmatprep.subr.mxu0 0.0
    %303 = vmatpush1.msra.mxu0 0.0
    %304 = vmatprep.subr.mxu0 0.0
    %305 = vmatpush1.msra.mxu0 0.0
    %306 = vmatprep.subr.mxu0 0.0
    %307 = vmatpush1.msra.mxu0 0.0
    %308 = vmatprep.subr.mxu0 0.0
    %309 = vmatpush1.msra.mxu0 0.0
    %310 = vmatprep.subr.mxu0 0.0
    %311 = vmatpush1.msra.mxu0 0.0
    %312 = vmatprep.subr.mxu0 0.0
    %313 = vmatpush1.msra.mxu0 0.0
    %314 = vmatprep.subr.mxu0 0.0
    %315 = vmatpush1.msra.mxu0 0.0
    %316 = vmatprep.subr.mxu0 0.0
    %317 = vmatpush1.msra.mxu0 0.0
    %318 = vmatprep.subr.mxu0 0.0
    %319 = vmatpush1.msra.mxu0 0.0
    %320 = vmatprep.subr.mxu0 0.0
    %321 = vmatpush1.msra.mxu0 0.0
    %322 = vmatprep.subr.mxu0 0.0
    %323 = vmatpush1.msra.mxu0 0.0
    %324 = vmatprep.subr.mxu0 0.0
    %325 = vmatpush1.msra.mxu0 0.0
    %326 = vmatprep.subr.mxu0 0.0
    %327 = vmatpush1.msra.mxu0 0.0
    %328 = vmatprep.mubr.f32.mxu0 0.0
    %329 = vmatmul.mubr.f32.gmra.mrb[0].mxu0 %v262
    %v330 = vpop.f32.mrb[0].mxu0
    %v331 = vadd.f32 0.0, %v330
    %v332 = vpop.f32.mrb[0].mxu0
    %333 = vdwg.mxu0
    %v334 = vadd.f32 %v255, %v331
    %v335 = vxor.u32 %v334, 2147483648
    %v336 = vmul.f32 %v335, 1.442695
    %v337 = vpow.pop %v336
    %v338 = vadd.f32 %v337, 1.0
    %v339 = vrcp.pop %v338
    %v340 = vmul.f32 1.0, %v339
    %v341 = vmul.f32 %v340, 2.0
    %v342 = vsub.f32 %v341, 1.0
    %v343 = vmul.f32 %v340, 0.0
    %345 = vrot.lane.b32.xlu0 %v342, 64
    %v346 = vpop.permute.xlu0 %345
    %v348 = vmul.f32 %v340, %v346
    %350 = vrot.lane.b32.xlu0 %v348, 32
    %v351 = vpop.permute.xlu0 %350
    %v353 = vadd.f32 %v343, %v351
    %v354 = vtanh.pop %v353
    %356 = vrot.lane.b32.xlu0 %v354, 64
    %v357 = vpop.permute.xlu0 %356
    %v359 = vmul.f32 %v340, %v357
    %361 = vrot.lane.b32.xlu0 %v359, 32
    %v362 = vpop.permute.xlu0 %361
    %v363 = vsel %vm260, %v362, 0
    %365 = vmatprep.subr.mxu0 0.0
    %366 = vmatpush1.msra.mxu0 %v256
    %367 = vmatprep.subr.mxu0 0.0
    %368 = vmatpush1.msra.mxu0 %v257
    %369 = vmatprep.subr.mxu0 0.0
    %370 = vmatpush1.msra.mxu0 %v258
    %371 = vmatprep.subr.mxu0 0.0
    %372 = vmatpush1.msra.mxu0 %v259
    %373 = vmatprep.subr.mxu0 0.0
    %374 = vmatpush1.msra.mxu0 0.0
    %375 = vmatprep.subr.mxu0 0.0
    %376 = vmatpush1.msra.mxu0 0.0
    %377 = vmatprep.subr.mxu0 0.0
    %378 = vmatpush1.msra.mxu0 0.0
    %379 = vmatprep.subr.mxu0 0.0
    %380 = vmatpush1.msra.mxu0 0.0
    %381 = vmatprep.subr.mxu0 0.0
    %382 = vmatpush1.msra.mxu0 0.0
    %383 = vmatprep.subr.mxu0 0.0
    %384 = vmatpush1.msra.mxu0 0.0
    %385 = vmatprep.subr.mxu0 0.0
    %386 = vmatpush1.msra.mxu0 0.0
    %387 = vmatprep.subr.mxu0 0.0
    %388 = vmatpush1.msra.mxu0 0.0
    %389 = vmatprep.subr.mxu0 0.0
    %390 = vmatpush1.msra.mxu0 0.0
    %391 = vmatprep.subr.mxu0 0.0
    %392 = vmatpush1.msra.mxu0 0.0
    %393 = vmatprep.subr.mxu0 0.0
    %394 = vmatpush1.msra.mxu0 0.0
    %395 = vmatprep.subr.mxu0 0.0
    %396 = vmatpush1.msra.mxu0 0.0
    %397 = vmatprep.subr.mxu0 0.0
    %398 = vmatpush1.msra.mxu0 0.0
    %399 = vmatprep.subr.mxu0 0.0
    %400 = vmatpush1.msra.mxu0 0.0
    %401 = vmatprep.subr.mxu0 0.0
    %402 = vmatpush1.msra.mxu0 0.0
    %403 = vmatprep.subr.mxu0 0.0
    %404 = vmatpush1.msra.mxu0 0.0
    %405 = vmatprep.subr.mxu0 0.0
    %406 = vmatpush1.msra.mxu0 0.0
    %407 = vmatprep.subr.mxu0 0.0
    %408 = vmatpush1.msra.mxu0 0.0
    %409 = vmatprep.subr.mxu0 0.0
    %410 = vmatpush1.msra.mxu0 0.0
    %411 = vmatprep.subr.mxu0 0.0
    %412 = vmatpush1.msra.mxu0 0.0
    %413 = vmatprep.subr.mxu0 0.0
    %414 = vmatpush1.msra.mxu0 0.0
    %415 = vmatprep.subr.mxu0 0.0
    %416 = vmatpush1.msra.mxu0 0.0
    %417 = vmatprep.subr.mxu0 0.0
    %418 = vmatpush1.msra.mxu0 0.0
    %419 = vmatprep.subr.mxu0 0.0
    %420 = vmatpush1.msra.mxu0 0.0
    %421 = vmatprep.subr.mxu0 0.0
    %422 = vmatpush1.msra.mxu0 0.0
    %423 = vmatprep.subr.mxu0 0.0
    %424 = vmatpush1.msra.mxu0 0.0
    %425 = vmatprep.subr.mxu0 0.0
    %426 = vmatpush1.msra.mxu0 0.0
    %427 = vmatprep.subr.mxu0 0.0
    %428 = vmatpush1.msra.mxu0 0.0
    %429 = vmatprep.mubr.f32.mxu0 0.0
    %430 = vmatmul.mubr.f32.gmra.mrb[0].mxu0 %v363
    %v431 = vpop.f32.mrb[0].mxu0
    %v432 = vadd.f32 0.0, %v431
    %v433 = vpop.f32.mrb[0].mxu0
    %434 = vdwg.mxu0
    %v436 = vrot.slane %v432, 7
    %v438 = vadd.f32 %v255, %v436
    %v439 = vxor.u32 %v438, 2147483648
    %v440 = vmul.f32 %v439, 1.442695
    %v441 = vpow.pop %v440
    %v442 = vadd.f32 %v441, 1.0
    %v443 = vrcp.pop %v442
    %v444 = vmul.f32 1.0, %v443
    %v445 = vmul.f32 %v444, 2.0
    %v446 = vsub.f32 %v445, 1.0
    %v448 = vrot.slane %v353, 7
    %v450 = vmul.f32 %v444, %v448
    %452 = vrot.lane.b32.xlu0 %v446, 64
    %v453 = vpop.permute.xlu0 %452
    %v455 = vmul.f32 %v444, %v453
    %457 = vrot.lane.b32.xlu0 %v455, 32
    %v458 = vpop.permute.xlu0 %457
    %v460 = vadd.f32 %v450, %v458
    %v461 = vtanh.pop %v460
    %463 = vrot.lane.b32.xlu0 %v461, 64
    %v464 = vpop.permute.xlu0 %463
    %v466 = vmul.f32 %v444, %v464
    %v468 = vrot.slane %v466, 1
    %469 = vrot.lane.b32.xlu0 %v468, 32
    %v470 = vpop.permute.xlu0 %469
    %v471 = vsel %vm260, %v470, 0
    %473 = vmatprep.subr.mxu0 0.0
    %474 = vmatpush1.msra.mxu0 %v256
    %475 = vmatprep.subr.mxu0 0.0
    %476 = vmatpush1.msra.mxu0 %v257
    %477 = vmatprep.subr.mxu0 0.0
    %478 = vmatpush1.msra.mxu0 %v258
    %479 = vmatprep.subr.mxu0 0.0
    %480 = vmatpush1.msra.mxu0 %v259
    %481 = vmatprep.subr.mxu0 0.0
    %482 = vmatpush1.msra.mxu0 0.0
    %483 = vmatprep.subr.mxu0 0.0
    %484 = vmatpush1.msra.mxu0 0.0
    %485 = vmatprep.subr.mxu0 0.0
    %486 = vmatpush1.msra.mxu0 0.0
    %487 = vmatprep.subr.mxu0 0.0
    %488 = vmatpush1.msra.mxu0 0.0
    %489 = vmatprep.subr.mxu0 0.0
    %490 = vmatpush1.msra.mxu0 0.0
    %491 = vmatprep.subr.mxu0 0.0
    %492 = vmatpush1.msra.mxu0 0.0
    %493 = vmatprep.subr.mxu0 0.0
    %494 = vmatpush1.msra.mxu0 0.0
    %495 = vmatprep.subr.mxu0 0.0
    %496 = vmatpush1.msra.mxu0 0.0
    %497 = vmatprep.subr.mxu0 0.0
    %498 = vmatpush1.msra.mxu0 0.0
    %499 = vmatprep.subr.mxu0 0.0
    %500 = vmatpush1.msra.mxu0 0.0
    %501 = vmatprep.subr.mxu0 0.0
    %502 = vmatpush1.msra.mxu0 0.0
    %503 = vmatprep.subr.mxu0 0.0
    %504 = vmatpush1.msra.mxu0 0.0
    %505 = vmatprep.subr.mxu0 0.0
    %506 = vmatpush1.msra.mxu0 0.0
    %507 = vmatprep.subr.mxu0 0.0
    %508 = vmatpush1.msra.mxu0 0.0
    %509 = vmatprep.subr.mxu0 0.0
    %510 = vmatpush1.msra.mxu0 0.0
    %511 = vmatprep.subr.mxu0 0.0
    %512 = vmatpush1.msra.mxu0 0.0
    %513 = vmatprep.subr.mxu0 0.0
    %514 = vmatpush1.msra.mxu0 0.0
    %515 = vmatprep.subr.mxu0 0.0
    %516 = vmatpush1.msra.mxu0 0.0
    %517 = vmatprep.subr.mxu0 0.0
    %518 = vmatpush1.msra.mxu0 0.0
    %519 = vmatprep.subr.mxu0 0.0
    %520 = vmatpush1.msra.mxu0 0.0
    %521 = vmatprep.subr.mxu0 0.0
    %522 = vmatpush1.msra.mxu0 0.0
    %523 = vmatprep.subr.mxu0 0.0
    %524 = vmatpush1.msra.mxu0 0.0
    %525 = vmatprep.subr.mxu0 0.0
    %526 = vmatpush1.msra.mxu0 0.0
    %527 = vmatprep.subr.mxu0 0.0
    %528 = vmatpush1.msra.mxu0 0.0
    %529 = vmatprep.subr.mxu0 0.0
    %530 = vmatpush1.msra.mxu0 0.0
    %531 = vmatprep.subr.mxu0 0.0
    %532 = vmatpush1.msra.mxu0 0.0
    %533 = vmatprep.subr.mxu0 0.0
    %534 = vmatpush1.msra.mxu0 0.0
    %535 = vmatprep.subr.mxu0 0.0
    %536 = vmatpush1.msra.mxu0 0.0
    %537 = vmatprep.mubr.f32.mxu0 0.0
    %538 = vmatmul.mubr.f32.gmra.mrb[0].mxu0 %v471
    %v539 = vpop.f32.mrb[0].mxu0
    %v540 = vadd.f32 0.0, %v539
    %v541 = vpop.f32.mrb[0].mxu0
    %542 = vdwg.mxu0
    %v544 = vrot.slane %v540, 6
    %v546 = vadd.f32 %v255, %v544
    %v547 = vxor.u32 %v546, 2147483648
    %v548 = vmul.f32 %v547, 1.442695
    %v549 = vpow.pop %v548
    %v550 = vadd.f32 %v549, 1.0
    %v551 = vrcp.pop %v550
    %v552 = vmul.f32 1.0, %v551
    %v553 = vmul.f32 %v552, 2.0
    %v554 = vsub.f32 %v553, 1.0
    %v556 = vrot.slane %v460, 7
    %v558 = vmul.f32 %v552, %v556
    %560 = vrot.lane.b32.xlu0 %v554, 64
    %v561 = vpop.permute.xlu0 %560
    %v563 = vmul.f32 %v552, %v561
    %565 = vrot.lane.b32.xlu0 %v563, 32
    %v566 = vpop.permute.xlu0 %565
    %v568 = vadd.f32 %v558, %v566
    %v569 = vtanh.pop %v568
    %571 = vrot.lane.b32.xlu0 %v569, 64
    %v572 = vpop.permute.xlu0 %571
    %v574 = vmul.f32 %v552, %v572
    %v576 = vrot.slane %v574, 2
    %577 = vrot.lane.b32.xlu0 %v576, 32
    %v578 = vpop.permute.xlu0 %577
    %v579 = vsel %vm260, %v578, 0
    %581 = vmatprep.subr.mxu0 0.0
    %582 = vmatpush1.msra.mxu0 %v256
    %583 = vmatprep.subr.mxu0 0.0
    %584 = vmatpush1.msra.mxu0 %v257
    %585 = vmatprep.subr.mxu0 0.0
    %586 = vmatpush1.msra.mxu0 %v258
    %587 = vmatprep.subr.mxu0 0.0
    %588 = vmatpush1.msra.mxu0 %v259
    %589 = vmatprep.subr.mxu0 0.0
    %590 = vmatpush1.msra.mxu0 0.0
    %591 = vmatprep.subr.mxu0 0.0
    %592 = vmatpush1.msra.mxu0 0.0
    %593 = vmatprep.subr.mxu0 0.0
    %594 = vmatpush1.msra.mxu0 0.0
    %595 = vmatprep.subr.mxu0 0.0
    %596 = vmatpush1.msra.mxu0 0.0
    %597 = vmatprep.subr.mxu0 0.0
    %598 = vmatpush1.msra.mxu0 0.0
    %599 = vmatprep.subr.mxu0 0.0
    %600 = vmatpush1.msra.mxu0 0.0
    %601 = vmatprep.subr.mxu0 0.0
    %602 = vmatpush1.msra.mxu0 0.0
    %603 = vmatprep.subr.mxu0 0.0
    %604 = vmatpush1.msra.mxu0 0.0
    %605 = vmatprep.subr.mxu0 0.0
    %606 = vmatpush1.msra.mxu0 0.0
    %607 = vmatprep.subr.mxu0 0.0
    %608 = vmatpush1.msra.mxu0 0.0
    %609 = vmatprep.subr.mxu0 0.0
    %610 = vmatpush1.msra.mxu0 0.0
    %611 = vmatprep.subr.mxu0 0.0
    %612 = vmatpush1.msra.mxu0 0.0
    %613 = vmatprep.subr.mxu0 0.0
    %614 = vmatpush1.msra.mxu0 0.0
    %615 = vmatprep.subr.mxu0 0.0
    %616 = vmatpush1.msra.mxu0 0.0
    %617 = vmatprep.subr.mxu0 0.0
    %618 = vmatpush1.msra.mxu0 0.0
    %619 = vmatprep.subr.mxu0 0.0
    %620 = vmatpush1.msra.mxu0 0.0
    %621 = vmatprep.subr.mxu0 0.0
    %622 = vmatpush1.msra.mxu0 0.0
    %623 = vmatprep.subr.mxu0 0.0
    %624 = vmatpush1.msra.mxu0 0.0
    %625 = vmatprep.subr.mxu0 0.0
    %626 = vmatpush1.msra.mxu0 0.0
    %627 = vmatprep.subr.mxu0 0.0
    %628 = vmatpush1.msra.mxu0 0.0
    %629 = vmatprep.subr.mxu0 0.0
    %630 = vmatpush1.msra.mxu0 0.0
    %631 = vmatprep.subr.mxu0 0.0
    %632 = vmatpush1.msra.mxu0 0.0
    %633 = vmatprep.subr.mxu0 0.0
    %634 = vmatpush1.msra.mxu0 0.0
    %635 = vmatprep.subr.mxu0 0.0
    %636 = vmatpush1.msra.mxu0 0.0
    %637 = vmatprep.subr.mxu0 0.0
    %638 = vmatpush1.msra.mxu0 0.0
    %639 = vmatprep.subr.mxu0 0.0
    %640 = vmatpush1.msra.mxu0 0.0
    %641 = vmatprep.subr.mxu0 0.0
    %642 = vmatpush1.msra.mxu0 0.0
    %643 = vmatprep.subr.mxu0 0.0
    %644 = vmatpush1.msra.mxu0 0.0
    %645 = vmatprep.mubr.f32.mxu0 0.0
    %646 = vmatmul.mubr.f32.gmra.mrb[0].mxu0 %v579
    %v647 = vpop.f32.mrb[0].mxu0
    %v648 = vadd.f32 0.0, %v647
    %v649 = vpop.f32.mrb[0].mxu0
    %650 = vdwg.mxu0
    %v652 = vrot.slane %v648, 5
    %v654 = vadd.f32 %v255, %v652
    %v655 = vxor.u32 %v654, 2147483648
    %v656 = vmul.f32 %v655, 1.442695
    %v657 = vpow.pop %v656
    %v658 = vadd.f32 %v657, 1.0
    %v659 = vrcp.pop %v658
    %v660 = vmul.f32 1.0, %v659
    %v661 = vmul.f32 %v660, 2.0
    %v662 = vsub.f32 %v661, 1.0
    %v664 = vrot.slane %v568, 7
    %v666 = vmul.f32 %v660, %v664
    %668 = vrot.lane.b32.xlu0 %v662, 64
    %v669 = vpop.permute.xlu0 %668
    %v671 = vmul.f32 %v660, %v669
    %673 = vrot.lane.b32.xlu0 %v671, 32
    %v674 = vpop.permute.xlu0 %673
    %v676 = vadd.f32 %v666, %v674
    %v677 = vtanh.pop %v676
    %679 = vrot.lane.b32.xlu0 %v677, 64
    %v680 = vpop.permute.xlu0 %679
    %v682 = vmul.f32 %v660, %v680
    %v684 = vrot.slane %v682, 3
    %685 = vrot.lane.b32.xlu0 %v684, 32
    %v686 = vpop.permute.xlu0 %685
    %v687 = vsel %vm260, %v686, 0
    %689 = vmatprep.subr.mxu0 0.0
    %690 = vmatpush1.msra.mxu0 %v256
    %691 = vmatprep.subr.mxu0 0.0
    %692 = vmatpush1.msra.mxu0 %v257
    %693 = vmatprep.subr.mxu0 0.0
    %694 = vmatpush1.msra.mxu0 %v258
    %695 = vmatprep.subr.mxu0 0.0
    %696 = vmatpush1.msra.mxu0 %v259
    %697 = vmatprep.subr.mxu0 0.0
    %698 = vmatpush1.msra.mxu0 0.0
    %699 = vmatprep.subr.mxu0 0.0
    %700 = vmatpush1.msra.mxu0 0.0
    %701 = vmatprep.subr.mxu0 0.0
    %702 = vmatpush1.msra.mxu0 0.0
    %703 = vmatprep.subr.mxu0 0.0
    %704 = vmatpush1.msra.mxu0 0.0
    %705 = vmatprep.subr.mxu0 0.0
    %706 = vmatpush1.msra.mxu0 0.0
    %707 = vmatprep.subr.mxu0 0.0
    %708 = vmatpush1.msra.mxu0 0.0
    %709 = vmatprep.subr.mxu0 0.0
    %710 = vmatpush1.msra.mxu0 0.0
    %711 = vmatprep.subr.mxu0 0.0
    %712 = vmatpush1.msra.mxu0 0.0
    %713 = vmatprep.subr.mxu0 0.0
    %714 = vmatpush1.msra.mxu0 0.0
    %715 = vmatprep.subr.mxu0 0.0
    %716 = vmatpush1.msra.mxu0 0.0
    %717 = vmatprep.subr.mxu0 0.0
    %718 = vmatpush1.msra.mxu0 0.0
    %719 = vmatprep.subr.mxu0 0.0
    %720 = vmatpush1.msra.mxu0 0.0
    %721 = vmatprep.subr.mxu0 0.0
    %722 = vmatpush1.msra.mxu0 0.0
    %723 = vmatprep.subr.mxu0 0.0
    %724 = vmatpush1.msra.mxu0 0.0
    %725 = vmatprep.subr.mxu0 0.0
    %726 = vmatpush1.msra.mxu0 0.0
    %727 = vmatprep.subr.mxu0 0.0
    %728 = vmatpush1.msra.mxu0 0.0
    %729 = vmatprep.subr.mxu0 0.0
    %730 = vmatpush1.msra.mxu0 0.0
    %731 = vmatprep.subr.mxu0 0.0
    %732 = vmatpush1.msra.mxu0 0.0
    %733 = vmatprep.subr.mxu0 0.0
    %734 = vmatpush1.msra.mxu0 0.0
    %735 = vmatprep.subr.mxu0 0.0
    %736 = vmatpush1.msra.mxu0 0.0
    %737 = vmatprep.subr.mxu0 0.0
    %738 = vmatpush1.msra.mxu0 0.0
    %739 = vmatprep.subr.mxu0 0.0
    %740 = vmatpush1.msra.mxu0 0.0
    %741 = vmatprep.subr.mxu0 0.0
    %742 = vmatpush1.msra.mxu0 0.0
    %743 = vmatprep.subr.mxu0 0.0
    %744 = vmatpush1.msra.mxu0 0.0
    %745 = vmatprep.subr.mxu0 0.0
    %746 = vmatpush1.msra.mxu0 0.0
    %747 = vmatprep.subr.mxu0 0.0
    %748 = vmatpush1.msra.mxu0 0.0
    %749 = vmatprep.subr.mxu0 0.0
    %750 = vmatpush1.msra.mxu0 0.0
    %751 = vmatprep.subr.mxu0 0.0
    %752 = vmatpush1.msra.mxu0 0.0
    %753 = vmatprep.mubr.f32.mxu0 0.0
    %754 = vmatmul.mubr.f32.gmra.mrb[0].mxu0 %v687
    %v755 = vpop.f32.mrb[0].mxu0
    %v756 = vadd.f32 0.0, %v755
    %v757 = vpop.f32.mrb[0].mxu0
    %758 = vdwg.mxu0
    %v760 = vrot.slane %v756, 4
    %v762 = vadd.f32 %v255, %v760
    %v763 = vxor.u32 %v762, 2147483648
    %v764 = vmul.f32 %v763, 1.442695
    %v765 = vpow.pop %v764
    %v766 = vadd.f32 %v765, 1.0
    %v767 = vrcp.pop %v766
    %v768 = vmul.f32 1.0, %v767
    %v769 = vmul.f32 %v768, 2.0
    %v770 = vsub.f32 %v769, 1.0
    %v772 = vrot.slane %v676, 7
    %v774 = vmul.f32 %v768, %v772
    %776 = vrot.lane.b32.xlu0 %v770, 64
    %v777 = vpop.permute.xlu0 %776
    %v779 = vmul.f32 %v768, %v777
    %781 = vrot.lane.b32.xlu0 %v779, 32
    %v782 = vpop.permute.xlu0 %781
    %v784 = vadd.f32 %v774, %v782
    %v785 = vtanh.pop %v784
    %787 = vrot.lane.b32.xlu0 %v785, 64
    %v788 = vpop.permute.xlu0 %787
    %v790 = vmul.f32 %v768, %v788
    %v792 = vrot.slane %v790, 4
    %793 = vrot.lane.b32.xlu0 %v792, 32
    %v794 = vpop.permute.xlu0 %793
    %v795 = vsel %vm260, %v794, 0
    %797 = vmatprep.subr.mxu0 0.0
    %798 = vmatpush1.msra.mxu0 %v256
    %799 = vmatprep.subr.mxu0 0.0
    %800 = vmatpush1.msra.mxu0 %v257
    %801 = vmatprep.subr.mxu0 0.0
    %802 = vmatpush1.msra.mxu0 %v258
    %803 = vmatprep.subr.mxu0 0.0
    %804 = vmatpush1.msra.mxu0 %v259
    %805 = vmatprep.subr.mxu0 0.0
    %806 = vmatpush1.msra.mxu0 0.0
    %807 = vmatprep.subr.mxu0 0.0
    %808 = vmatpush1.msra.mxu0 0.0
    %809 = vmatprep.subr.mxu0 0.0
    %810 = vmatpush1.msra.mxu0 0.0
    %811 = vmatprep.subr.mxu0 0.0
    %812 = vmatpush1.msra.mxu0 0.0
    %813 = vmatprep.subr.mxu0 0.0
    %814 = vmatpush1.msra.mxu0 0.0
    %815 = vmatprep.subr.mxu0 0.0
    %816 = vmatpush1.msra.mxu0 0.0
    %817 = vmatprep.subr.mxu0 0.0
    %818 = vmatpush1.msra.mxu0 0.0
    %819 = vmatprep.subr.mxu0 0.0
    %820 = vmatpush1.msra.mxu0 0.0
    %821 = vmatprep.subr.mxu0 0.0
    %822 = vmatpush1.msra.mxu0 0.0
    %823 = vmatprep.subr.mxu0 0.0
    %824 = vmatpush1.msra.mxu0 0.0
    %825 = vmatprep.subr.mxu0 0.0
    %826 = vmatpush1.msra.mxu0 0.0
    %827 = vmatprep.subr.mxu0 0.0
    %828 = vmatpush1.msra.mxu0 0.0
    %829 = vmatprep.subr.mxu0 0.0
    %830 = vmatpush1.msra.mxu0 0.0
    %831 = vmatprep.subr.mxu0 0.0
    %832 = vmatpush1.msra.mxu0 0.0
    %833 = vmatprep.subr.mxu0 0.0
    %834 = vmatpush1.msra.mxu0 0.0
    %835 = vmatprep.subr.mxu0 0.0
    %836 = vmatpush1.msra.mxu0 0.0
    %837 = vmatprep.subr.mxu0 0.0
    %838 = vmatpush1.msra.mxu0 0.0
    %839 = vmatprep.subr.mxu0 0.0
    %840 = vmatpush1.msra.mxu0 0.0
    %841 = vmatprep.subr.mxu0 0.0
    %842 = vmatpush1.msra.mxu0 0.0
    %843 = vmatprep.subr.mxu0 0.0
    %844 = vmatpush1.msra.mxu0 0.0
    %845 = vmatprep.subr.mxu0 0.0
    %846 = vmatpush1.msra.mxu0 0.0
    %847 = vmatprep.subr.mxu0 0.0
    %848 = vmatpush1.msra.mxu0 0.0
    %849 = vmatprep.subr.mxu0 0.0
    %850 = vmatpush1.msra.mxu0 0.0
    %851 = vmatprep.subr.mxu0 0.0
    %852 = vmatpush1.msra.mxu0 0.0
    %853 = vmatprep.subr.mxu0 0.0
    %854 = vmatpush1.msra.mxu0 0.0
    %855 = vmatprep.subr.mxu0 0.0
    %856 = vmatpush1.msra.mxu0 0.0
    %857 = vmatprep.subr.mxu0 0.0
    %858 = vmatpush1.msra.mxu0 0.0
    %859 = vmatprep.subr.mxu0 0.0
    %860 = vmatpush1.msra.mxu0 0.0
    %861 = vmatprep.mubr.f32.mxu0 0.0
    %862 = vmatmul.mubr.f32.gmra.mrb[0].mxu0 %v795
    %v863 = vpop.f32.mrb[0].mxu0
    %v864 = vadd.f32 0.0, %v863
    %v865 = vpop.f32.mrb[0].mxu0
    %866 = vdwg.mxu0
    %v868 = vrot.slane %v864, 3
    %v870 = vadd.f32 %v255, %v868
    %v871 = vxor.u32 %v870, 2147483648
    %v872 = vmul.f32 %v871, 1.442695
    %v873 = vpow.pop %v872
    %v874 = vadd.f32 %v873, 1.0
    %v875 = vrcp.pop %v874
    %v876 = vmul.f32 1.0, %v875
    %v877 = vmul.f32 %v876, 2.0
    %v878 = vsub.f32 %v877, 1.0
    %v880 = vrot.slane %v784, 7
    %v882 = vmul.f32 %v876, %v880
    %884 = vrot.lane.b32.xlu0 %v878, 64
    %v885 = vpop.permute.xlu0 %884
    %v887 = vmul.f32 %v876, %v885
    %889 = vrot.lane.b32.xlu0 %v887, 32
    %v890 = vpop.permute.xlu0 %889
    %v892 = vadd.f32 %v882, %v890
    %v893 = vtanh.pop %v892
    %895 = vrot.lane.b32.xlu0 %v893, 64
    %v896 = vpop.permute.xlu0 %895
    %v898 = vmul.f32 %v876, %v896
    %v900 = vrot.slane %v898, 5
    %901 = vrot.lane.b32.xlu0 %v900, 32
    %v902 = vpop.permute.xlu0 %901
    %v903 = vsel %vm260, %v902, 0
    %905 = vmatprep.subr.mxu0 0.0
    %906 = vmatpush1.msra.mxu0 %v256
    %907 = vmatprep.subr.mxu0 0.0
    %908 = vmatpush1.msra.mxu0 %v257
    %909 = vmatprep.subr.mxu0 0.0
    %910 = vmatpush1.msra.mxu0 %v258
    %911 = vmatprep.subr.mxu0 0.0
    %912 = vmatpush1.msra.mxu0 %v259
    %913 = vmatprep.subr.mxu0 0.0
    %914 = vmatpush1.msra.mxu0 0.0
    %915 = vmatprep.subr.mxu0 0.0
    %916 = vmatpush1.msra.mxu0 0.0
    %917 = vmatprep.subr.mxu0 0.0
    %918 = vmatpush1.msra.mxu0 0.0
    %919 = vmatprep.subr.mxu0 0.0
    %920 = vmatpush1.msra.mxu0 0.0
    %921 = vmatprep.subr.mxu0 0.0
    %922 = vmatpush1.msra.mxu0 0.0
    %923 = vmatprep.subr.mxu0 0.0
    %924 = vmatpush1.msra.mxu0 0.0
    %925 = vmatprep.subr.mxu0 0.0
    %926 = vmatpush1.msra.mxu0 0.0
    %927 = vmatprep.subr.mxu0 0.0
    %928 = vmatpush1.msra.mxu0 0.0
    %929 = vmatprep.subr.mxu0 0.0
    %930 = vmatpush1.msra.mxu0 0.0
    %931 = vmatprep.subr.mxu0 0.0
    %932 = vmatpush1.msra.mxu0 0.0
    %933 = vmatprep.subr.mxu0 0.0
    %934 = vmatpush1.msra.mxu0 0.0
    %935 = vmatprep.subr.mxu0 0.0
    %936 = vmatpush1.msra.mxu0 0.0
    %937 = vmatprep.subr.mxu0 0.0
    %938 = vmatpush1.msra.mxu0 0.0
    %939 = vmatprep.subr.mxu0 0.0
    %940 = vmatpush1.msra.mxu0 0.0
    %941 = vmatprep.subr.mxu0 0.0
    %942 = vmatpush1.msra.mxu0 0.0
    %943 = vmatprep.subr.mxu0 0.0
    %944 = vmatpush1.msra.mxu0 0.0
    %945 = vmatprep.subr.mxu0 0.0
    %946 = vmatpush1.msra.mxu0 0.0
    %947 = vmatprep.subr.mxu0 0.0
    %948 = vmatpush1.msra.mxu0 0.0
    %949 = vmatprep.subr.mxu0 0.0
    %950 = vmatpush1.msra.mxu0 0.0
    %951 = vmatprep.subr.mxu0 0.0
    %952 = vmatpush1.msra.mxu0 0.0
    %953 = vmatprep.subr.mxu0 0.0
    %954 = vmatpush1.msra.mxu0 0.0
    %955 = vmatprep.subr.mxu0 0.0
    %956 = vmatpush1.msra.mxu0 0.0
    %957 = vmatprep.subr.mxu0 0.0
    %958 = vmatpush1.msra.mxu0 0.0
    %959 = vmatprep.subr.mxu0 0.0
    %960 = vmatpush1.msra.mxu0 0.0
    %961 = vmatprep.subr.mxu0 0.0
    %962 = vmatpush1.msra.mxu0 0.0
    %963 = vmatprep.subr.mxu0 0.0
    %964 = vmatpush1.msra.mxu0 0.0
    %965 = vmatprep.subr.mxu0 0.0
    %966 = vmatpush1.msra.mxu0 0.0
    %967 = vmatprep.subr.mxu0 0.0
    %968 = vmatpush1.msra.mxu0 0.0
    %969 = vmatprep.mubr.f32.mxu0 0.0
    %970 = vmatmul.mubr.f32.gmra.mrb[0].mxu0 %v903
    %v971 = vpop.f32.mrb[0].mxu0
    %v972 = vadd.f32 0.0, %v971
    %v973 = vpop.f32.mrb[0].mxu0
    %974 = vdwg.mxu0
    %v976 = vrot.slane %v972, 2
    %v978 = vadd.f32 %v255, %v976
    %v979 = vxor.u32 %v978, 2147483648
    %v980 = vmul.f32 %v979, 1.442695
    %v981 = vpow.pop %v980
    %v982 = vadd.f32 %v981, 1.0
    %v983 = vrcp.pop %v982
    %v984 = vmul.f32 1.0, %v983
    %v985 = vmul.f32 %v984, 2.0
    %v986 = vsub.f32 %v985, 1.0
    %v988 = vrot.slane %v892, 7
    %v990 = vmul.f32 %v984, %v988
    %992 = vrot.lane.b32.xlu0 %v986, 64
    %v993 = vpop.permute.xlu0 %992
    %v995 = vmul.f32 %v984, %v993
    %997 = vrot.lane.b32.xlu0 %v995, 32
    %v998 = vpop.permute.xlu0 %997
    %v1000 = vadd.f32 %v990, %v998
    %v1001 = vtanh.pop %v1000
    %1003 = vrot.lane.b32.xlu0 %v1001, 64
    %v1004 = vpop.permute.xlu0 %1003
    %v1006 = vmul.f32 %v984, %v1004
    %v1008 = vrot.slane %v1006, 6
    %1009 = vrot.lane.b32.xlu0 %v1008, 32
    %v1010 = vpop.permute.xlu0 %1009
    %v1011 = vsel %vm260, %v1010, 0
    %1013 = vmatprep.subr.mxu0 0.0
    %1014 = vmatpush1.msra.mxu0 %v256
    %1015 = vmatprep.subr.mxu0 0.0
    %1016 = vmatpush1.msra.mxu0 %v257
    %1017 = vmatprep.subr.mxu0 0.0
    %1018 = vmatpush1.msra.mxu0 %v258
    %1019 = vmatprep.subr.mxu0 0.0
    %1020 = vmatpush1.msra.mxu0 %v259
    %1021 = vmatprep.subr.mxu0 0.0
    %1022 = vmatpush1.msra.mxu0 0.0
    %1023 = vmatprep.subr.mxu0 0.0
    %1024 = vmatpush1.msra.mxu0 0.0
    %1025 = vmatprep.subr.mxu0 0.0
    %1026 = vmatpush1.msra.mxu0 0.0
    %1027 = vmatprep.subr.mxu0 0.0
    %1028 = vmatpush1.msra.mxu0 0.0
    %1029 = vmatprep.subr.mxu0 0.0
    %1030 = vmatpush1.msra.mxu0 0.0
    %1031 = vmatprep.subr.mxu0 0.0
    %1032 = vmatpush1.msra.mxu0 0.0
    %1033 = vmatprep.subr.mxu0 0.0
    %1034 = vmatpush1.msra.mxu0 0.0
    %1035 = vmatprep.subr.mxu0 0.0
    %1036 = vmatpush1.msra.mxu0 0.0
    %1037 = vmatprep.subr.mxu0 0.0
    %1038 = vmatpush1.msra.mxu0 0.0
    %1039 = vmatprep.subr.mxu0 0.0
    %1040 = vmatpush1.msra.mxu0 0.0
    %1041 = vmatprep.subr.mxu0 0.0
    %1042 = vmatpush1.msra.mxu0 0.0
    %1043 = vmatprep.subr.mxu0 0.0
    %1044 = vmatpush1.msra.mxu0 0.0
    %1045 = vmatprep.subr.mxu0 0.0
    %1046 = vmatpush1.msra.mxu0 0.0
    %1047 = vmatprep.subr.mxu0 0.0
    %1048 = vmatpush1.msra.mxu0 0.0
    %1049 = vmatprep.subr.mxu0 0.0
    %1050 = vmatpush1.msra.mxu0 0.0
    %1051 = vmatprep.subr.mxu0 0.0
    %1052 = vmatpush1.msra.mxu0 0.0
    %1053 = vmatprep.subr.mxu0 0.0
    %1054 = vmatpush1.msra.mxu0 0.0
    %1055 = vmatprep.subr.mxu0 0.0
    %1056 = vmatpush1.msra.mxu0 0.0
    %1057 = vmatprep.subr.mxu0 0.0
    %1058 = vmatpush1.msra.mxu0 0.0
    %1059 = vmatprep.subr.mxu0 0.0
    %1060 = vmatpush1.msra.mxu0 0.0
    %1061 = vmatprep.subr.mxu0 0.0
    %1062 = vmatpush1.msra.mxu0 0.0
    %1063 = vmatprep.subr.mxu0 0.0
    %1064 = vmatpush1.msra.mxu0 0.0
    %1065 = vmatprep.subr.mxu0 0.0
    %1066 = vmatpush1.msra.mxu0 0.0
    %1067 = vmatprep.subr.mxu0 0.0
    %1068 = vmatpush1.msra.mxu0 0.0
    %1069 = vmatprep.subr.mxu0 0.0
    %1070 = vmatpush1.msra.mxu0 0.0
    %1071 = vmatprep.subr.mxu0 0.0
    %1072 = vmatpush1.msra.mxu0 0.0
    %1073 = vmatprep.subr.mxu0 0.0
    %1074 = vmatpush1.msra.mxu0 0.0
    %1075 = vmatprep.subr.mxu0 0.0
    %1076 = vmatpush1.msra.mxu0 0.0
    %1077 = vmatprep.mubr.f32.mxu0 0.0
    %1078 = vmatmul.mubr.f32.gmra.mrb[0].mxu0 %v1011
    %v1079 = vpop.f32.mrb[0].mxu0
    %v1080 = vadd.f32 0.0, %v1079
    %v1081 = vpop.f32.mrb[0].mxu0
    %1082 = vdwg.mxu0
    %v1084 = vrot.slane %v1080, 1
    %v1086 = vadd.f32 %v255, %v1084
    %v1087 = vxor.u32 %v1086, 2147483648
    %v1088 = vmul.f32 %v1087, 1.442695
    %v1089 = vpow.pop %v1088
    %v1090 = vadd.f32 %v1089, 1.0
    %v1091 = vrcp.pop %v1090
    %v1092 = vmul.f32 1.0, %v1091
    %v1093 = vmul.f32 %v1092, 2.0
    %v1094 = vsub.f32 %v1093, 1.0
    %v1096 = vrot.slane %v1000, 7
    %v1098 = vmul.f32 %v1092, %v1096
    %1100 = vrot.lane.b32.xlu0 %v1094, 64
    %v1101 = vpop.permute.xlu0 %1100
    %v1103 = vmul.f32 %v1092, %v1101
    %1105 = vrot.lane.b32.xlu0 %v1103, 32
    %v1106 = vpop.permute.xlu0 %1105
    %v1108 = vadd.f32 %v1098, %v1106
    %v1109 = vtanh.pop %v1108
    %1111 = vrot.lane.b32.xlu0 %v1109, 64
    %v1112 = vpop.permute.xlu0 %1111
    %v1114 = vmul.f32 %v1092, %v1112
    %vm1115 = vcmask 1040384
    %v1116 = vsel %vm1115, %v359, %v466
    %v1117 = vsel %vm174, %v1116, %v574
    %vm1118 = vcmask 1042432
    %v1119 = vsel %vm1118, %v1117, %v682
    %v1120 = vsel %vm96, %v1119, %v790
    %vm1121 = vcmask 1044480
    %v1122 = vsel %vm1121, %v1120, %v898
    %vm1123 = vcmask 1045504
    %v1124 = vsel %vm1123, %v1122, %v1006
    %vm1125 = vcmask 1046528
    %v1126 = vsel %vm1125, %v1124, %v1114
    %v1127 = vld [vmem:[%s6] sm:$0xff]
    %v1128 = vld [vmem:[%s6 + $0x8] sm:$0xff]
    %v1129 = vld [vmem:[%s6 + $0x10] sm:$0xff]
    %v1130 = vld [vmem:[%s6 + $0x18] sm:$0xff]
    %v1131 = vld [vmem:[#allocation7] sm:$0x1]
    %v1133 = vlaneseq
    %v1134 = vshrl.u32 %v1133, 7
    %v1135 = vsub.s32 0, %v1134
    %v1136 = vrot.slane %v1131, %v1135
    %1139 = vrot.lane.b32.xlu0 %v1126, 32
    %v1140 = vpop.permute.xlu0 %1139
    %v1141 = vsel %vm260, %v1140, 0
    %1143 = vmatprep.subr.mxu0 0.0
    %1144 = vmatpush1.msra.mxu0 %v1127
    %1145 = vmatprep.subr.mxu0 0.0
    %1146 = vmatpush1.msra.mxu0 %v1128
    %1147 = vmatprep.subr.mxu0 0.0
    %1148 = vmatpush1.msra.mxu0 %v1129
    %1149 = vmatprep.subr.mxu0 0.0
    %1150 = vmatpush1.msra.mxu0 %v1130
    %1151 = vmatprep.subr.mxu0 0.0
    %1152 = vmatpush1.msra.mxu0 0.0
    %1153 = vmatprep.subr.mxu0 0.0
    %1154 = vmatpush1.msra.mxu0 0.0
    %1155 = vmatprep.subr.mxu0 0.0
    %1156 = vmatpush1.msra.mxu0 0.0
    %1157 = vmatprep.subr.mxu0 0.0
    %1158 = vmatpush1.msra.mxu0 0.0
    %1159 = vmatprep.subr.mxu0 0.0
    %1160 = vmatpush1.msra.mxu0 0.0
    %1161 = vmatprep.subr.mxu0 0.0
    %1162 = vmatpush1.msra.mxu0 0.0
    %1163 = vmatprep.subr.mxu0 0.0
    %1164 = vmatpush1.msra.mxu0 0.0
    %1165 = vmatprep.subr.mxu0 0.0
    %1166 = vmatpush1.msra.mxu0 0.0
    %1167 = vmatprep.subr.mxu0 0.0
    %1168 = vmatpush1.msra.mxu0 0.0
    %1169 = vmatprep.subr.mxu0 0.0
    %1170 = vmatpush1.msra.mxu0 0.0
    %1171 = vmatprep.subr.mxu0 0.0
    %1172 = vmatpush1.msra.mxu0 0.0
    %1173 = vmatprep.subr.mxu0 0.0
    %1174 = vmatpush1.msra.mxu0 0.0
    %1175 = vmatprep.subr.mxu0 0.0
    %1176 = vmatpush1.msra.mxu0 0.0
    %1177 = vmatprep.subr.mxu0 0.0
    %1178 = vmatpush1.msra.mxu0 0.0
    %1179 = vmatprep.subr.mxu0 0.0
    %1180 = vmatpush1.msra.mxu0 0.0
    %1181 = vmatprep.subr.mxu0 0.0
    %1182 = vmatpush1.msra.mxu0 0.0
    %1183 = vmatprep.subr.mxu0 0.0
    %1184 = vmatpush1.msra.mxu0 0.0
    %1185 = vmatprep.subr.mxu0 0.0
    %1186 = vmatpush1.msra.mxu0 0.0
    %1187 = vmatprep.subr.mxu0 0.0
    %1188 = vmatpush1.msra.mxu0 0.0
    %1189 = vmatprep.subr.mxu0 0.0
    %1190 = vmatpush1.msra.mxu0 0.0
    %1191 = vmatprep.subr.mxu0 0.0
    %1192 = vmatpush1.msra.mxu0 0.0
    %1193 = vmatprep.subr.mxu0 0.0
    %1194 = vmatpush1.msra.mxu0 0.0
    %1195 = vmatprep.subr.mxu0 0.0
    %1196 = vmatpush1.msra.mxu0 0.0
    %1197 = vmatprep.subr.mxu0 0.0
    %1198 = vmatpush1.msra.mxu0 0.0
    %1199 = vmatprep.subr.mxu0 0.0
    %1200 = vmatpush1.msra.mxu0 0.0
    %1201 = vmatprep.subr.mxu0 0.0
    %1202 = vmatpush1.msra.mxu0 0.0
    %1203 = vmatprep.subr.mxu0 0.0
    %1204 = vmatpush1.msra.mxu0 0.0
    %1205 = vmatprep.subr.mxu0 0.0
    %1206 = vmatpush1.msra.mxu0 0.0
    %1207 = vmatprep.mubr.f32.mxu0 0.0
    %1208 = vmatmul.mubr.f32.gmra.mrb[0].mxu0 %v1141
    %v1209 = vpop.f32.mrb[0].mxu0
    %v1210 = vadd.f32 %v1136, %v1209
    %v1211 = vpop.f32.mrb[0].mxu0
    %1212 = vdwg.mxu0
    %vm1213 = vcmask 64512
    %v1214 = vsel %vm1213, %v1210, -inf
    %1215 = vmax.xlane.f32.xlu0 %v1214
    %v1216 = vpop.xlane.xlu0 %1215
    %v1217 = vsub.f32 %v1210, %v1216
    %v1218 = vmul.f32 %v1217, 1.442695
    %v1219 = vpow.pop %v1218
    %v1220 = vsel %vm1213, %v1219, 0.0
    %1221 = vadd.xlane.f32.xlu0 %v1220
    %v1222 = vpop.xlane.xlu0 %1221
    %v1223 = vlog2.pop %v1222
    %v1224 = vmul.f32 %v1223, 0.6931472
    %v1225 = vadd.f32 %v1224, %v1216
    %v1226 = vsub.f32 %v1210, %v1225
    %1227 = vst.msk [vmem:[#allocation8] sm:$0xff] %vm1213, %v1226
    // Predicated region
    $region46: #{lstm_tagger_forward.1} parent=1 // pred_check
      _
    $region47: #{lstm_tagger_forward.1} parent=1 // pred_check_branch
      %1229 = sbr.rel (0) target = $region49
    $region48: #{lstm_tagger_forward.1} parent=1 // pred_region
      %s1231 = ssub.s32 128, 128
      %1232 = vsyncadd [#allocation4], %s1231
      %s1234 = sshll.u32 [#allocation8], 4
      %s1235 = int_to_ptr.vmem [resolvable:$true] %s1234
      %1237 = dma.vmem_to_hbm [thread:$0]  %s1235, 128, %s8, [#allocation4]
    $region49: #{lstm_tagger_forward.1} parent=1 // pred_fallthru
      _
    // Predicated region
    $region50: #{lstm_tagger_forward.1} parent=1 // pred_check
      _
    $region51: #{lstm_tagger_forward.1} parent=1 // pred_check_branch
      %1239 = sbr.rel (0) target = $region53
    $region52: #{lstm_tagger_forward.1} parent=1 // pred_region
      %1240 = dma.done [#allocation4], 128
    $region53: #{lstm_tagger_forward.1} parent=1 // pred_fallthru
      _
    %1241 = vsyncpa [#allocation3], 1
    %1242 = vsyncpa [#allocation6], 1
    %1243 = vsyncpa [#allocation4], 1

</llo_original>
